<compile_context>
chip_gen: v5e
topology: v5e:2x2
jax: 0.10.0
libtpu: 0.0.40
codegen_flags: <defaults>
</compile_context>

<pallas_src>
import functools
import math

import jax
import jax.numpy as jnp
from jax.experimental import pallas as pl
from jax.experimental.pallas import tpu as pltpu

LN_EPS = 1e-5  # nn.LayerNorm default


# ----------------------------------------------------------------------------
# Pallas kernel: the full encoder stack. grid=(num_layers,); the activation
# (B*S, D) lives in a VMEM scratch across grid steps (layers).
# ----------------------------------------------------------------------------
def encoder_stack_kernel(
    x_ref,                                    # (B*S, D) f32   embedded input
    wq_ref, bq_ref, wk_ref, bk_ref,           # (H, D, dh) bf16 / (H, 1, dh) f32
    wv_ref, bv_ref,
    wo_ref, bo_ref,                           # (H, dh, D) bf16 / (1, D) f32
    g1_ref, be1_ref,                          # LayerNorm1 gamma/beta (1, D) f32
    w1_ref, bf1_ref, w2_ref, bf2_ref,         # FFN: (D,dff) bf16,(1,dff),(dff,D) bf16,(1,D)
    g2_ref, be2_ref,                          # LayerNorm2 gamma/beta (1, D) f32
    o_ref,                                    # (B*S, D_PAD) f32 lane-dense output
    x_scr,                                    # (B*S, D) f32 VMEM, resident across layers
    *, batch: int, seq: int, n_heads: int,
):
    layer = pl.program_id(0)
    B, S, H = batch, seq, n_heads
    BS = B * S
    D = x_scr.shape[-1]
    dh = D // H
    N = B * H                                 # attention batch dim = batch x heads
    scale = 1.0 / math.sqrt(dh)

    # Layer 0: pull the embedded activations into the resident scratch.
    @pl.when(layer == 0)
    def _():
        x_scr[...] = x_ref[...]

    x = x_scr[...]                            # (BS, D) fp32 residual stream
    xb = x.astype(jnp.bfloat16)               # bf16 MXU operands, fp32 accumulation

    # ---- multi-head self-attention (src_mask=None) ---------------------------
    # Heads are a leading dot_general batch dim: activations broadcast over heads,
    # head-major weights broadcast over batch -> one batched matmul per projection
    # (no per-head slicing / concatenation).
    x_n = jnp.broadcast_to(xb.reshape(B, 1, S, D), (B, H, S, D)).reshape(N, S, D)

    def project(w_ref, b_ref):
        w_n = jnp.broadcast_to(w_ref[...][None], (B, H, D, dh)).reshape(N, D, dh)
        b_n = jnp.broadcast_to(b_ref[...][None], (B, H, 1, dh)).reshape(N, 1, dh)
        y = jnp.einsum("nsd,nde->nse", x_n, w_n,
                       preferred_element_type=jnp.float32)
        return y + b_n                        # (N, S, dh) f32

    q = project(wq_ref, bq_ref)
    k = project(wk_ref, bk_ref)
    v = project(wv_ref, bv_ref)

    s = jnp.einsum("nqd,nkd->nqk",
                   q.astype(jnp.bfloat16), k.astype(jnp.bfloat16),
                   preferred_element_type=jnp.float32) * scale      # (N, S, S)

    # softmax in fp32; denominator reciprocal on the (otherwise idle) EUP.
    s = s - jnp.max(s, axis=-1, keepdims=True)
    p = jnp.exp(s)
    p = p * pl.reciprocal(jnp.sum(p, axis=-1, keepdims=True), approx=True)

    ctx = jnp.einsum("nqk,nkd->nqd",
                     p.astype(jnp.bfloat16), v.astype(jnp.bfloat16),
                     preferred_element_type=jnp.float32)            # (N, S, dh)

    # Output projection: per-head partials in full d_model, then sum over heads
    # (equivalent to concat(heads) @ Wo, without the concat/transpose).
    wo_n = jnp.broadcast_to(wo_ref[...][None], (B, H, dh, D)).reshape(N, dh, D)
    mha = jnp.einsum("nsd,nde->nse",
                     ctx.astype(jnp.bfloat16), wo_n,
                     preferred_element_type=jnp.float32)            # (N, S, D)
    mha = jnp.sum(mha.reshape(B, H, S, D), axis=1).reshape(BS, D) + bo_ref[...]

    # ---- residual + LayerNorm 1 (fp32; dropout == identity in eval) ----------
    h1 = mha + x
    mu1 = jnp.mean(h1, axis=-1, keepdims=True)
    var1 = jnp.mean(jnp.square(h1 - mu1), axis=-1, keepdims=True)
    h1 = (h1 - mu1) * jax.lax.rsqrt(var1 + LN_EPS) * g1_ref[...] + be1_ref[...]

    # ---- position-wise feed-forward: dense matmuls over all B*S rows ---------
    f = jnp.dot(h1.astype(jnp.bfloat16), w1_ref[...],
                preferred_element_type=jnp.float32) + bf1_ref[...]
    f = jnp.maximum(f, 0.0)
    f = jnp.dot(f.astype(jnp.bfloat16), w2_ref[...],
                preferred_element_type=jnp.float32) + bf2_ref[...]

    # ---- residual + LayerNorm 2 ----------------------------------------------
    h2 = f + h1
    mu2 = jnp.mean(h2, axis=-1, keepdims=True)
    var2 = jnp.mean(jnp.square(h2 - mu2), axis=-1, keepdims=True)
    out = (h2 - mu2) * jax.lax.rsqrt(var2 + LN_EPS) * g2_ref[...] + be2_ref[...]

    x_scr[...] = out                          # feeds the next layer

    # Final layer: single lane-dense (>=128-lane) store of the whole result.
    @pl.when(layer == pl.num_programs(0) - 1)
    def _():
        pad_lanes = o_ref.shape[-1] - D
        if pad_lanes:
            o_ref[...] = jnp.concatenate(
                [out, jnp.zeros((BS, pad_lanes), jnp.float32)], axis=-1)
        else:
            o_ref[...] = out


# ----------------------------------------------------------------------------
# Wrapper: one pallas_call for the whole stack.
# ----------------------------------------------------------------------------
def encoder_stack_pallas(x_emb, params, n_heads):
    """x_emb: (B, S, D) f32 embedded inputs; params: layer-stacked dict
    (see pack_encoder_params). Returns (B, S, D) f32."""
    B, S, D = x_emb.shape
    H = n_heads
    dh = D // H
    L = params["wq"].shape[0]
    d_ff = params["w1"].shape[-1]
    BS = B * S
    d_pad = 128 * pl.cdiv(D, 128)             # lane-dense output slab width

    x2d = x_emb.astype(jnp.float32).reshape(BS, D)

    def wspec(*shape):
        # Layer-stacked parameter: squeeze the leading layer axis; full block else.
        n = len(shape)
        return pl.BlockSpec((None,) + shape, lambda l: (l,) + (0,) * n)

    in_specs = [
        pl.BlockSpec((BS, D), lambda l: (0, 0)),     # activations (constant block)
        wspec(H, D, dh), wspec(H, 1, dh),            # wq, bq
        wspec(H, D, dh), wspec(H, 1, dh),            # wk, bk
        wspec(H, D, dh), wspec(H, 1, dh),            # wv, bv
        wspec(H, dh, D), wspec(1, D),                # wo, bo
        wspec(1, D), wspec(1, D),                    # ln1 gamma, beta
        wspec(D, d_ff), wspec(1, d_ff),              # w1, b1
        wspec(d_ff, D), wspec(1, D),                 # w2, b2
        wspec(1, D), wspec(1, D),                    # ln2 gamma, beta
    ]

    # Advisory cost hint for the XLA scheduler.
    flops = L * (2 * BS * D * D * 4                  # q/k/v/out projections
                 + 2 * B * H * S * S * dh * 2        # scores + context
                 + 2 * BS * D * d_ff * 2)            # FFN
    transcendentals = L * (B * H * S * S + B * H * S + 2 * BS)
    bytes_accessed = (x2d.size * 4 + BS * d_pad * 4
                      + sum(int(v.size) * v.dtype.itemsize for v in params.values()))

    out2d = pl.pallas_call(
        functools.partial(encoder_stack_kernel, batch=B, seq=S, n_heads=H),
        out_shape=jax.ShapeDtypeStruct((BS, d_pad), jnp.float32),
        grid=(L,),
        in_specs=in_specs,
        out_specs=pl.BlockSpec((BS, d_pad), lambda l: (0, 0)),
        scratch_shapes=[pltpu.VMEM((BS, D), jnp.float32)],
        compiler_params=pltpu.CompilerParams(
            dimension_semantics=("arbitrary",),      # layers are sequential
            vmem_limit_bytes=32 * 1024 * 1024,
        ),
        cost_estimate=pl.CostEstimate(
            flops=int(flops),
            transcendentals=int(transcendentals),
            bytes_accessed=int(bytes_accessed)),
    )(
        x2d,
        params["wq"], params["bq"], params["wk"], params["bk"],
        params["wv"], params["bv"], params["wo"], params["bo"],
        params["ln1_g"], params["ln1_b"],
        params["w1"], params["b1"], params["w2"], params["b2"],
        params["ln2_g"], params["ln2_b"],
    )
    return out2d[:, :D].reshape(B, S, D)


# ----------------------------------------------------------------------------
# Parameter construction, packing, and embedding glue.
# ----------------------------------------------------------------------------
def sinusoidal_positional_encoding(max_len, d_model):
    pos = jnp.arange(max_len, dtype=jnp.float32)[:, None]
    i = jnp.arange(0, d_model, 2, dtype=jnp.float32)[None, :]
    angle = pos / jnp.power(10000.0, i / d_model)
    pe = jnp.zeros((max_len, d_model), dtype=jnp.float32)
    pe = pe.at[:, 0::2].set(jnp.sin(angle))
    pe = pe.at[:, 1::2].set(jnp.cos(angle))
    return pe


def init_encoder_params(key, num_layers, d_model, d_ff, enc_vocab_size):
    """Synthetic per-layer parameters in the PyTorch-equivalent (in, out) layout."""
    std = 0.02
    keys = jax.random.split(key, num_layers * 12 + 1)
    ki = iter(keys)

    def rnd(shape):
        return jax.random.normal(next(ki), shape, jnp.float32) * std

    tok_emb = rnd((enc_vocab_size, d_model))
    layers = []
    for _ in range(num_layers):
        layers.append({
            "wq": rnd((d_model, d_model)), "bq": rnd((d_model,)),
            "wk": rnd((d_model, d_model)), "bk": rnd((d_model,)),
            "wv": rnd((d_model, d_model)), "bv": rnd((d_model,)),
            "wo": rnd((d_model, d_model)), "bo": rnd((d_model,)),
            "ln1_g": jnp.ones((d_model,), jnp.float32),
            "ln1_b": jnp.zeros((d_model,), jnp.float32),
            "w1": rnd((d_model, d_ff)), "b1": rnd((d_ff,)),
            "w2": rnd((d_ff, d_model)), "b2": rnd((d_model,)),
            "ln2_g": jnp.ones((d_model,), jnp.float32),
            "ln2_b": jnp.zeros((d_model,), jnp.float32),
        })
    return tok_emb, layers


def pack_encoder_params(layers, n_heads):
    """Stack per-layer params across layers and rearrange attention weights
    head-major ((H, D, dh) / (H, dh, D)) for the batched in-kernel contractions.
    The head split is contiguous d_model chunks, matching the PyTorch module."""
    L = len(layers)
    D = layers[0]["wq"].shape[0]
    dh = D // n_heads
    d_ff = layers[0]["w1"].shape[1]
    bf16 = jnp.bfloat16

    def stack(name):
        return jnp.stack([p[name] for p in layers])

    def head_major(w):                            # (L, D, D) -> (L, H, D, dh)
        return jnp.transpose(w.reshape(L, D, n_heads, dh), (0, 2, 1, 3))

    return {
        "wq": head_major(stack("wq")).astype(bf16),
        "wk": head_major(stack("wk")).astype(bf16),
        "wv": head_major(stack("wv")).astype(bf16),
        "bq": stack("bq").reshape(L, n_heads, 1, dh),
        "bk": stack("bk").reshape(L, n_heads, 1, dh),
        "bv": stack("bv").reshape(L, n_heads, 1, dh),
        "wo": stack("wo").reshape(L, n_heads, dh, D).astype(bf16),
        "bo": stack("bo").reshape(L, 1, D),
        "ln1_g": stack("ln1_g").reshape(L, 1, D),
        "ln1_b": stack("ln1_b").reshape(L, 1, D),
        "w1": stack("w1").astype(bf16),
        "b1": stack("b1").reshape(L, 1, d_ff),
        "w2": stack("w2").astype(bf16),
        "b2": stack("b2").reshape(L, 1, D),
        "ln2_g": stack("ln2_g").reshape(L, 1, D),
        "ln2_b": stack("ln2_b").reshape(L, 1, D),
    }


def encoder_forward(token_ids, tok_emb, pos_enc, packed_params, n_heads):
    """token_ids: (B, S) int32 -> (B, S, D) float32."""
    B, S = token_ids.shape
    # Embedding glue (data-dependent gather + positional add); dropout == identity.
    x = tok_emb[token_ids] + pos_enc[:S][None, :, :]
    return encoder_stack_pallas(x, packed_params, n_heads)


# ----------------------------------------------------------------------------
# Pure-JAX fp32 reference (matches the PyTorch module; used for a sanity check).
# ----------------------------------------------------------------------------
def _layer_norm_ref(h, g, b):
    mu = jnp.mean(h, axis=-1, keepdims=True)
    var = jnp.mean(jnp.square(h - mu), axis=-1, keepdims=True)
    return (h - mu) / jnp.sqrt(var + LN_EPS) * g + b


def encoder_reference(token_ids, tok_emb, pos_enc, layers, n_heads):
    B, S = token_ids.shape
    D = tok_emb.shape[1]
    dh = D // n_heads
    x = tok_emb[token_ids] + pos_enc[:S][None, :, :]
    for p in layers:
        q = x @ p["wq"] + p["bq"]
        k = x @ p["wk"] + p["bk"]
        v = x @ p["wv"] + p["bv"]

        def split(t):
            return t.reshape(B, S, n_heads, dh).transpose(0, 2, 1, 3)

        qh, kh, vh = split(q), split(k), split(v)
        s = jnp.einsum("bhqd,bhkd->bhqk", qh, kh) / math.sqrt(dh)
        a = jax.nn.softmax(s, axis=-1)
        ctx = jnp.einsum("bhqk,bhkd->bhqd", a, vh)
        attn = ctx.transpose(0, 2, 1, 3).reshape(B, S, D)
        mha = attn @ p["wo"] + p["bo"]
        h1 = _layer_norm_ref(mha + x, p["ln1_g"], p["ln1_b"])
        f = jnp.maximum(h1 @ p["w1"] + p["b1"], 0.0) @ p["w2"] + p["b2"]
        x = _layer_norm_ref(f + h1, p["ln2_g"], p["ln2_b"])
    return x


# ----------------------------------------------------------------------------
if __name__ == "__main__":
    num_layers = 2
    n_heads = 4
    d_model = 32
    d_ff = 64
    enc_vocab_size = 50
    max_len = 16
    B, S = 2, 8

    key = jax.random.PRNGKey(0)
    k_tok, k_params = jax.random.split(key)

    tok_emb, layer_params = init_encoder_params(
        k_params, num_layers, d_model, d_ff, enc_vocab_size)
    pos_enc = sinusoidal_positional_encoding(max_len, d_model)
    packed = pack_encoder_params(layer_params, n_heads)

    token_ids = jax.random.randint(k_tok, (B, S), 0, enc_vocab_size, dtype=jnp.int32)

    out = encoder_forward(token_ids, tok_emb, pos_enc, packed, n_heads)
    out = jax.block_until_ready(out)

    assert out.shape == (B, S, d_model)
    assert bool(jnp.all(jnp.isfinite(out)))

    # Sanity check vs the fp32 reference (bf16 MXU operands -> loose tolerance).
    ref = jax.block_until_ready(
        encoder_reference(token_ids, tok_emb, pos_enc, layer_params, n_heads))
    max_err = float(jnp.max(jnp.abs(out - ref)))
    assert max_err < 5e-2, f"max |kernel - reference| = {max_err}"

    print("KERNEL_OK")
</pallas_src>

<mosaic_0001>
module attributes {stable_mosaic.version = 11 : i64} {
  func.func @encoder_stack_kernel(%arg0: i32, %arg1: memref<16x32xf32, #tpu.memory_space<vmem>>, %arg2: memref<1x4x32x8xbf16, #tpu.memory_space<vmem>>, %arg3: memref<1x4x1x8xf32, #tpu.memory_space<vmem>>, %arg4: memref<1x4x32x8xbf16, #tpu.memory_space<vmem>>, %arg5: memref<1x4x1x8xf32, #tpu.memory_space<vmem>>, %arg6: memref<1x4x32x8xbf16, #tpu.memory_space<vmem>>, %arg7: memref<1x4x1x8xf32, #tpu.memory_space<vmem>>, %arg8: memref<1x4x8x32xbf16, #tpu.memory_space<vmem>>, %arg9: memref<1x1x32xf32, #tpu.memory_space<vmem>>, %arg10: memref<1x1x32xf32, #tpu.memory_space<vmem>>, %arg11: memref<1x1x32xf32, #tpu.memory_space<vmem>>, %arg12: memref<1x32x64xbf16, #tpu.memory_space<vmem>>, %arg13: memref<1x1x64xf32, #tpu.memory_space<vmem>>, %arg14: memref<1x64x32xbf16, #tpu.memory_space<vmem>>, %arg15: memref<1x1x32xf32, #tpu.memory_space<vmem>>, %arg16: memref<1x1x32xf32, #tpu.memory_space<vmem>>, %arg17: memref<1x1x32xf32, #tpu.memory_space<vmem>>, %arg18: memref<16x128xf32, #tpu.memory_space<vmem>>, %arg19: memref<16x32xf32, #tpu.memory_space<vmem>>) attributes {dimension_semantics = [#tpu.dimension_semantics<arbitrary>], iteration_bounds = array<i64: 2>, scalar_prefetch = 0 : i64, scratch_operands = 1 : i64, tpu.core_type = #tpu.core_type<tc>, window_params = [{pipeline_mode = #tpu.pipeline_mode<synchronous>, transform_indices = @transform_0, window_bounds = array<i64: 16, 32>}, {transform_indices = @transform_1, window_bounds = array<i64: 1, 4, 32, 8>}, {transform_indices = @transform_2, window_bounds = array<i64: 1, 4, 1, 8>}, {transform_indices = @transform_3, window_bounds = array<i64: 1, 4, 32, 8>}, {transform_indices = @transform_4, window_bounds = array<i64: 1, 4, 1, 8>}, {transform_indices = @transform_5, window_bounds = array<i64: 1, 4, 32, 8>}, {transform_indices = @transform_6, window_bounds = array<i64: 1, 4, 1, 8>}, {transform_indices = @transform_7, window_bounds = array<i64: 1, 4, 8, 32>}, {transform_indices = @transform_8, window_bounds = array<i64: 1, 1, 32>}, {transform_indices = @transform_9, window_bounds = array<i64: 1, 1, 32>}, {transform_indices = @transform_10, window_bounds = array<i64: 1, 1, 32>}, {transform_indices = @transform_11, window_bounds = array<i64: 1, 32, 64>}, {transform_indices = @transform_12, window_bounds = array<i64: 1, 1, 64>}, {transform_indices = @transform_13, window_bounds = array<i64: 1, 64, 32>}, {transform_indices = @transform_14, window_bounds = array<i64: 1, 1, 32>}, {transform_indices = @transform_15, window_bounds = array<i64: 1, 1, 32>}, {transform_indices = @transform_16, window_bounds = array<i64: 1, 1, 32>}, {pipeline_mode = #tpu.pipeline_mode<synchronous>, transform_indices = @transform_17, window_bounds = array<i64: 16, 128>}]} {
    %c0_i32 = arith.constant 0 : i32
    %0 = arith.cmpi eq, %arg0, %c0_i32 : i32
    %1 = arith.extui %0 : i1 to i32
    %c0_i32_0 = arith.constant 0 : i32
    %2 = arith.cmpi ne, %1, %c0_i32_0 : i32
    scf.if %2 {
      %c0_82 = arith.constant 0 : index
      %c0_83 = arith.constant 0 : index
      %163 = vector.load %arg1[%c0_82, %c0_83] : memref<16x32xf32, #tpu.memory_space<vmem>>, vector<16x32xf32>
      %c0_84 = arith.constant 0 : index
      %c0_85 = arith.constant 0 : index
      %164 = vector.load %arg19[%c0_84, %c0_85] : memref<16x32xf32, #tpu.memory_space<vmem>>, vector<16x32xf32>
      tpu.vector_store %arg19[%c0_84, %c0_85], %163 {strides = array<i32>} : memref<16x32xf32, #tpu.memory_space<vmem>>, vector<16x32xf32>,
    } else {
    }
    %c0 = arith.constant 0 : index
    %c0_1 = arith.constant 0 : index
    %3 = vector.load %arg19[%c0, %c0_1] : memref<16x32xf32, #tpu.memory_space<vmem>>, vector<16x32xf32>
    %4 = arith.truncf %3 : vector<16x32xf32> to vector<16x32xbf16>
    %5 = vector.shape_cast %4 : vector<16x32xbf16> to vector<2x1x8x32xbf16>
    %6 = vector.shape_cast %5 : vector<2x1x8x32xbf16> to vector<2x1x8x32xbf16>
    %7 = vector.broadcast %6 : vector<2x1x8x32xbf16> to vector<2x4x8x32xbf16>
    %8 = vector.shape_cast %7 : vector<2x4x8x32xbf16> to vector<8x8x32xbf16>
    %c0_2 = arith.constant 0 : index
    %c0_3 = arith.constant 0 : index
    %c0_4 = arith.constant 0 : index
    %c0_5 = arith.constant 0 : index
    %9 = vector.load %arg2[%c0_2, %c0_3, %c0_4, %c0_5] : memref<1x4x32x8xbf16, #tpu.memory_space<vmem>>, vector<1x4x32x8xbf16>
    %10 = vector.shape_cast %9 : vector<1x4x32x8xbf16> to vector<4x32x8xbf16>
    %11 = vector.shape_cast %10 : vector<4x32x8xbf16> to vector<1x4x32x8xbf16>
    %12 = vector.shape_cast %11 : vector<1x4x32x8xbf16> to vector<1x4x32x8xbf16>
    %13 = vector.broadcast %12 : vector<1x4x32x8xbf16> to vector<2x4x32x8xbf16>
    %14 = vector.shape_cast %13 : vector<2x4x32x8xbf16> to vector<8x32x8xbf16>
    %c0_6 = arith.constant 0 : index
    %c0_7 = arith.constant 0 : index
    %c0_8 = arith.constant 0 : index
    %c0_9 = arith.constant 0 : index
    %15 = vector.load %arg3[%c0_6, %c0_7, %c0_8, %c0_9] : memref<1x4x1x8xf32, #tpu.memory_space<vmem>>, vector<1x4x1x8xf32>
    %16 = vector.shape_cast %15 : vector<1x4x1x8xf32> to vector<4x1x8xf32>
    %17 = vector.shape_cast %16 : vector<4x1x8xf32> to vector<1x4x1x8xf32>
    %18 = vector.shape_cast %17 : vector<1x4x1x8xf32> to vector<1x4x1x8xf32>
    %19 = vector.broadcast %18 : vector<1x4x1x8xf32> to vector<2x4x1x8xf32>
    %20 = vector.shape_cast %19 : vector<2x4x1x8xf32> to vector<8x1x8xf32>
    "tpu.trace_start"() <{level = 10 : i32, message = "nsd,nde->nse"}> : () -> ()
    %cst = arith.constant dense<0.000000e+00> : vector<8x8x8xf32>
    %21 = tpu.matmul %8, %14, %cst {dimension_numbers = #tpu.dot_dimension_numbers<[2], [1], [1], [2], [0, 0, 0, 1, 1, 2], [0], [0]>} : vector<8x8x32xbf16>, vector<8x32x8xbf16>, vector<8x8x8xf32> -> vector<8x8x8xf32>
    "tpu.trace_stop"() : () -> ()
    %22 = vector.broadcast %20 : vector<8x1x8xf32> to vector<8x8x8xf32>
    %23 = arith.addf %21, %22 : vector<8x8x8xf32>
    %c0_10 = arith.constant 0 : index
    %c0_11 = arith.constant 0 : index
    %c0_12 = arith.constant 0 : index
    %c0_13 = arith.constant 0 : index
    %24 = vector.load %arg4[%c0_10, %c0_11, %c0_12, %c0_13] : memref<1x4x32x8xbf16, #tpu.memory_space<vmem>>, vector<1x4x32x8xbf16>
    %25 = vector.shape_cast %24 : vector<1x4x32x8xbf16> to vector<4x32x8xbf16>
    %26 = vector.shape_cast %25 : vector<4x32x8xbf16> to vector<1x4x32x8xbf16>
    %27 = vector.shape_cast %26 : vector<1x4x32x8xbf16> to vector<1x4x32x8xbf16>
    %28 = vector.broadcast %27 : vector<1x4x32x8xbf16> to vector<2x4x32x8xbf16>
    %29 = vector.shape_cast %28 : vector<2x4x32x8xbf16> to vector<8x32x8xbf16>
    %c0_14 = arith.constant 0 : index
    %c0_15 = arith.constant 0 : index
    %c0_16 = arith.constant 0 : index
    %c0_17 = arith.constant 0 : index
    %30 = vector.load %arg5[%c0_14, %c0_15, %c0_16, %c0_17] : memref<1x4x1x8xf32, #tpu.memory_space<vmem>>, vector<1x4x1x8xf32>
    %31 = vector.shape_cast %30 : vector<1x4x1x8xf32> to vector<4x1x8xf32>
    %32 = vector.shape_cast %31 : vector<4x1x8xf32> to vector<1x4x1x8xf32>
    %33 = vector.shape_cast %32 : vector<1x4x1x8xf32> to vector<1x4x1x8xf32>
    %34 = vector.broadcast %33 : vector<1x4x1x8xf32> to vector<2x4x1x8xf32>
    %35 = vector.shape_cast %34 : vector<2x4x1x8xf32> to vector<8x1x8xf32>
    "tpu.trace_start"() <{level = 10 : i32, message = "nsd,nde->nse"}> : () -> ()
    %cst_18 = arith.constant dense<0.000000e+00> : vector<8x8x8xf32>
    %36 = tpu.matmul %8, %29, %cst_18 {dimension_numbers = #tpu.dot_dimension_numbers<[2], [1], [1], [2], [0, 0, 0, 1, 1, 2], [0], [0]>} : vector<8x8x32xbf16>, vector<8x32x8xbf16>, vector<8x8x8xf32> -> vector<8x8x8xf32>
    "tpu.trace_stop"() : () -> ()
    %37 = vector.broadcast %35 : vector<8x1x8xf32> to vector<8x8x8xf32>
    %38 = arith.addf %36, %37 : vector<8x8x8xf32>
    %c0_19 = arith.constant 0 : index
    %c0_20 = arith.constant 0 : index
    %c0_21 = arith.constant 0 : index
    %c0_22 = arith.constant 0 : index
    %39 = vector.load %arg6[%c0_19, %c0_20, %c0_21, %c0_22] : memref<1x4x32x8xbf16, #tpu.memory_space<vmem>>, vector<1x4x32x8xbf16>
    %40 = vector.shape_cast %39 : vector<1x4x32x8xbf16> to vector<4x32x8xbf16>
    %41 = vector.shape_cast %40 : vector<4x32x8xbf16> to vector<1x4x32x8xbf16>
    %42 = vector.shape_cast %41 : vector<1x4x32x8xbf16> to vector<1x4x32x8xbf16>
    %43 = vector.broadcast %42 : vector<1x4x32x8xbf16> to vector<2x4x32x8xbf16>
    %44 = vector.shape_cast %43 : vector<2x4x32x8xbf16> to vector<8x32x8xbf16>
    %c0_23 = arith.constant 0 : index
    %c0_24 = arith.constant 0 : index
    %c0_25 = arith.constant 0 : index
    %c0_26 = arith.constant 0 : index
    %45 = vector.load %arg7[%c0_23, %c0_24, %c0_25, %c0_26] : memref<1x4x1x8xf32, #tpu.memory_space<vmem>>, vector<1x4x1x8xf32>
    %46 = vector.shape_cast %45 : vector<1x4x1x8xf32> to vector<4x1x8xf32>
    %47 = vector.shape_cast %46 : vector<4x1x8xf32> to vector<1x4x1x8xf32>
    %48 = vector.shape_cast %47 : vector<1x4x1x8xf32> to vector<1x4x1x8xf32>
    %49 = vector.broadcast %48 : vector<1x4x1x8xf32> to vector<2x4x1x8xf32>
    %50 = vector.shape_cast %49 : vector<2x4x1x8xf32> to vector<8x1x8xf32>
    "tpu.trace_start"() <{level = 10 : i32, message = "nsd,nde->nse"}> : () -> ()
    %cst_27 = arith.constant dense<0.000000e+00> : vector<8x8x8xf32>
    %51 = tpu.matmul %8, %44, %cst_27 {dimension_numbers = #tpu.dot_dimension_numbers<[2], [1], [1], [2], [0, 0, 0, 1, 1, 2], [0], [0]>} : vector<8x8x32xbf16>, vector<8x32x8xbf16>, vector<8x8x8xf32> -> vector<8x8x8xf32>
    "tpu.trace_stop"() : () -> ()
    %52 = vector.broadcast %50 : vector<8x1x8xf32> to vector<8x8x8xf32>
    %53 = arith.addf %51, %52 : vector<8x8x8xf32>
    %54 = arith.truncf %23 : vector<8x8x8xf32> to vector<8x8x8xbf16>
    %55 = arith.truncf %38 : vector<8x8x8xf32> to vector<8x8x8xbf16>
    "tpu.trace_start"() <{level = 10 : i32, message = "nqd,nkd->nqk"}> : () -> ()
    %cst_28 = arith.constant dense<0.000000e+00> : vector<8x8x8xf32>
    %56 = tpu.matmul %54, %55, %cst_28 {dimension_numbers = #tpu.dot_dimension_numbers<[2], [2], [1], [1], [0, 0, 0, 1, 1, 1], [0], [0]>} : vector<8x8x8xbf16>, vector<8x8x8xbf16>, vector<8x8x8xf32> -> vector<8x8x8xf32>
    "tpu.trace_stop"() : () -> ()
    %cst_29 = arith.constant 0.353553385 : f32
    %57 = vector.broadcast %cst_29 : f32 to vector<8x8x8xf32>
    %58 = arith.mulf %56, %57 : vector<8x8x8xf32>
    %cst_30 = arith.constant dense<0xFF800000> : vector<8x8xf32>
    %59 = vector.multi_reduction <maximumf>, %58, %cst_30 [2] : vector<8x8x8xf32> to vector<8x8xf32>
    %60 = vector.shape_cast %59 : vector<8x8xf32> to vector<8x8x1xf32>
    %61 = vector.broadcast %60 : vector<8x8x1xf32> to vector<8x8x8xf32>
    %62 = arith.subf %58, %61 : vector<8x8x8xf32>
    %63 = math.exp %62 : vector<8x8x8xf32>
    %cst_31 = arith.constant dense<0.000000e+00> : vector<8x8xf32>
    %64 = vector.multi_reduction <add>, %63, %cst_31 [2] : vector<8x8x8xf32> to vector<8x8xf32>
    %65 = vector.shape_cast %64 : vector<8x8xf32> to vector<8x8x1xf32>
    %66 = tpu.reciprocal %65 {approx = true} : vector<8x8x1xf32> -> vector<8x8x1xf32>
    %67 = vector.broadcast %66 : vector<8x8x1xf32> to vector<8x8x8xf32>
    %68 = arith.mulf %63, %67 : vector<8x8x8xf32>
    %69 = arith.truncf %68 : vector<8x8x8xf32> to vector<8x8x8xbf16>
    %70 = arith.truncf %53 : vector<8x8x8xf32> to vector<8x8x8xbf16>
    "tpu.trace_start"() <{level = 10 : i32, message = "nqk,nkd->nqd"}> : () -> ()
    %cst_32 = arith.constant dense<0.000000e+00> : vector<8x8x8xf32>
    %71 = tpu.matmul %69, %70, %cst_32 {dimension_numbers = #tpu.dot_dimension_numbers<[2], [1], [1], [2], [0, 0, 0, 1, 1, 2], [0], [0]>} : vector<8x8x8xbf16>, vector<8x8x8xbf16>, vector<8x8x8xf32> -> vector<8x8x8xf32>
    "tpu.trace_stop"() : () -> ()
    %c0_33 = arith.constant 0 : index
    %c0_34 = arith.constant 0 : index
    %c0_35 = arith.constant 0 : index
    %c0_36 = arith.constant 0 : index
    %72 = vector.load %arg8[%c0_33, %c0_34, %c0_35, %c0_36] : memref<1x4x8x32xbf16, #tpu.memory_space<vmem>>, vector<1x4x8x32xbf16>
    %73 = vector.shape_cast %72 : vector<1x4x8x32xbf16> to vector<4x8x32xbf16>
    %74 = vector.shape_cast %73 : vector<4x8x32xbf16> to vector<1x4x8x32xbf16>
    %75 = vector.shape_cast %74 : vector<1x4x8x32xbf16> to vector<1x4x8x32xbf16>
    %76 = vector.broadcast %75 : vector<1x4x8x32xbf16> to vector<2x4x8x32xbf16>
    %77 = vector.shape_cast %76 : vector<2x4x8x32xbf16> to vector<8x8x32xbf16>
    %78 = arith.truncf %71 : vector<8x8x8xf32> to vector<8x8x8xbf16>
    "tpu.trace_start"() <{level = 10 : i32, message = "nsd,nde->nse"}> : () -> ()
    %cst_37 = arith.constant dense<0.000000e+00> : vector<8x8x32xf32>
    %79 = tpu.matmul %78, %77, %cst_37 {dimension_numbers = #tpu.dot_dimension_numbers<[2], [1], [1], [2], [0, 0, 0, 1, 1, 2], [0], [0]>} : vector<8x8x8xbf16>, vector<8x8x32xbf16>, vector<8x8x32xf32> -> vector<8x8x32xf32>
    "tpu.trace_stop"() : () -> ()
    %80 = vector.shape_cast %79 : vector<8x8x32xf32> to vector<2x4x8x32xf32>
    %cst_38 = arith.constant dense<0.000000e+00> : vector<2x8x32xf32>
    %81 = vector.multi_reduction <add>, %80, %cst_38 [1] : vector<2x4x8x32xf32> to vector<2x8x32xf32>
    %82 = vector.shape_cast %81 : vector<2x8x32xf32> to vector<16x32xf32>
    %c0_39 = arith.constant 0 : index
    %c0_40 = arith.constant 0 : index
    %c0_41 = arith.constant 0 : index
    %83 = vector.load %arg9[%c0_39, %c0_40, %c0_41] : memref<1x1x32xf32, #tpu.memory_space<vmem>>, vector<1x1x32xf32>
    %84 = vector.shape_cast %83 : vector<1x1x32xf32> to vector<1x32xf32>
    %85 = vector.broadcast %84 : vector<1x32xf32> to vector<16x32xf32>
    %86 = arith.addf %82, %85 : vector<16x32xf32>
    %87 = arith.addf %86, %3 : vector<16x32xf32>
    %cst_42 = arith.constant dense<0.000000e+00> : vector<16xf32>
    %88 = vector.multi_reduction <add>, %87, %cst_42 [1] : vector<16x32xf32> to vector<16xf32>
    %89 = vector.shape_cast %88 : vector<16xf32> to vector<16x1xf32>
    %cst_43 = arith.constant 3.200000e+01 : f32
    %90 = vector.broadcast %cst_43 : f32 to vector<16x1xf32>
    %91 = arith.divf %89, %90 : vector<16x1xf32>
    %92 = vector.broadcast %91 : vector<16x1xf32> to vector<16x32xf32>
    %93 = arith.subf %87, %92 : vector<16x32xf32>
    %94 = arith.mulf %93, %93 : vector<16x32xf32>
    %cst_44 = arith.constant dense<0.000000e+00> : vector<16xf32>
    %95 = vector.multi_reduction <add>, %94, %cst_44 [1] : vector<16x32xf32> to vector<16xf32>
    %96 = vector.shape_cast %95 : vector<16xf32> to vector<16x1xf32>
    %cst_45 = arith.constant 3.200000e+01 : f32
    %97 = vector.broadcast %cst_45 : f32 to vector<16x1xf32>
    %98 = arith.divf %96, %97 : vector<16x1xf32>
    %99 = vector.broadcast %91 : vector<16x1xf32> to vector<16x32xf32>
    %100 = arith.subf %87, %99 : vector<16x32xf32>
    %cst_46 = arith.constant 9.99999974E-6 : f32
    %101 = vector.broadcast %cst_46 : f32 to vector<16x1xf32>
    %102 = arith.addf %98, %101 : vector<16x1xf32>
    %103 = math.rsqrt %102 : vector<16x1xf32>
    %104 = vector.broadcast %103 : vector<16x1xf32> to vector<16x32xf32>
    %105 = arith.mulf %100, %104 : vector<16x32xf32>
    %c0_47 = arith.constant 0 : index
    %c0_48 = arith.constant 0 : index
    %c0_49 = arith.constant 0 : index
    %106 = vector.load %arg10[%c0_47, %c0_48, %c0_49] : memref<1x1x32xf32, #tpu.memory_space<vmem>>, vector<1x1x32xf32>
    %107 = vector.shape_cast %106 : vector<1x1x32xf32> to vector<1x32xf32>
    %108 = vector.broadcast %107 : vector<1x32xf32> to vector<16x32xf32>
    %109 = arith.mulf %105, %108 : vector<16x32xf32>
    %c0_50 = arith.constant 0 : index
    %c0_51 = arith.constant 0 : index
    %c0_52 = arith.constant 0 : index
    %110 = vector.load %arg11[%c0_50, %c0_51, %c0_52] : memref<1x1x32xf32, #tpu.memory_space<vmem>>, vector<1x1x32xf32>
    %111 = vector.shape_cast %110 : vector<1x1x32xf32> to vector<1x32xf32>
    %112 = vector.broadcast %111 : vector<1x32xf32> to vector<16x32xf32>
    %113 = arith.addf %109, %112 : vector<16x32xf32>
    %114 = arith.truncf %113 : vector<16x32xf32> to vector<16x32xbf16>
    %c0_53 = arith.constant 0 : index
    %c0_54 = arith.constant 0 : index
    %c0_55 = arith.constant 0 : index
    %115 = vector.load %arg12[%c0_53, %c0_54, %c0_55] : memref<1x32x64xbf16, #tpu.memory_space<vmem>>, vector<1x32x64xbf16>
    %116 = vector.shape_cast %115 : vector<1x32x64xbf16> to vector<32x64xbf16>
    %cst_56 = arith.constant dense<0.000000e+00> : vector<16x64xf32>
    %117 = tpu.matmul %114, %116, %cst_56 {dimension_numbers = #tpu.dot_dimension_numbers<[1], [0], [0], [1], [0, 0, 1, 1], [], []>} : vector<16x32xbf16>, vector<32x64xbf16>, vector<16x64xf32> -> vector<16x64xf32>
    %c0_57 = arith.constant 0 : index
    %c0_58 = arith.constant 0 : index
    %c0_59 = arith.constant 0 : index
    %118 = vector.load %arg13[%c0_57, %c0_58, %c0_59] : memref<1x1x64xf32, #tpu.memory_space<vmem>>, vector<1x1x64xf32>
    %119 = vector.shape_cast %118 : vector<1x1x64xf32> to vector<1x64xf32>
    %120 = vector.broadcast %119 : vector<1x64xf32> to vector<16x64xf32>
    %121 = arith.addf %117, %120 : vector<16x64xf32>
    %cst_60 = arith.constant 0.000000e+00 : f32
    %122 = vector.broadcast %cst_60 : f32 to vector<16x64xf32>
    %123 = arith.maximumf %121, %122 : vector<16x64xf32>
    %124 = arith.truncf %123 : vector<16x64xf32> to vector<16x64xbf16>
    %c0_61 = arith.constant 0 : index
    %c0_62 = arith.constant 0 : index
    %c0_63 = arith.constant 0 : index
    %125 = vector.load %arg14[%c0_61, %c0_62, %c0_63] : memref<1x64x32xbf16, #tpu.memory_space<vmem>>, vector<1x64x32xbf16>
    %126 = vector.shape_cast %125 : vector<1x64x32xbf16> to vector<64x32xbf16>
    %cst_64 = arith.constant dense<0.000000e+00> : vector<16x32xf32>
    %127 = tpu.matmul %124, %126, %cst_64 {dimension_numbers = #tpu.dot_dimension_numbers<[1], [0], [0], [1], [0, 0, 1, 1], [], []>} : vector<16x64xbf16>, vector<64x32xbf16>, vector<16x32xf32> -> vector<16x32xf32>
    %c0_65 = arith.constant 0 : index
    %c0_66 = arith.constant 0 : index
    %c0_67 = arith.constant 0 : index
    %128 = vector.load %arg15[%c0_65, %c0_66, %c0_67] : memref<1x1x32xf32, #tpu.memory_space<vmem>>, vector<1x1x32xf32>
    %129 = vector.shape_cast %128 : vector<1x1x32xf32> to vector<1x32xf32>
    %130 = vector.broadcast %129 : vector<1x32xf32> to vector<16x32xf32>
    %131 = arith.addf %127, %130 : vector<16x32xf32>
    %132 = arith.addf %131, %113 : vector<16x32xf32>
    %cst_68 = arith.constant dense<0.000000e+00> : vector<16xf32>
    %133 = vector.multi_reduction <add>, %132, %cst_68 [1] : vector<16x32xf32> to vector<16xf32>
    %134 = vector.shape_cast %133 : vector<16xf32> to vector<16x1xf32>
    %cst_69 = arith.constant 3.200000e+01 : f32
    %135 = vector.broadcast %cst_69 : f32 to vector<16x1xf32>
    %136 = arith.divf %134, %135 : vector<16x1xf32>
    %137 = vector.broadcast %136 : vector<16x1xf32> to vector<16x32xf32>
    %138 = arith.subf %132, %137 : vector<16x32xf32>
    %139 = arith.mulf %138, %138 : vector<16x32xf32>
    %cst_70 = arith.constant dense<0.000000e+00> : vector<16xf32>
    %140 = vector.multi_reduction <add>, %139, %cst_70 [1] : vector<16x32xf32> to vector<16xf32>
    %141 = vector.shape_cast %140 : vector<16xf32> to vector<16x1xf32>
    %cst_71 = arith.constant 3.200000e+01 : f32
    %142 = vector.broadcast %cst_71 : f32 to vector<16x1xf32>
    %143 = arith.divf %141, %142 : vector<16x1xf32>
    %144 = vector.broadcast %136 : vector<16x1xf32> to vector<16x32xf32>
    %145 = arith.subf %132, %144 : vector<16x32xf32>
    %cst_72 = arith.constant 9.99999974E-6 : f32
    %146 = vector.broadcast %cst_72 : f32 to vector<16x1xf32>
    %147 = arith.addf %143, %146 : vector<16x1xf32>
    %148 = math.rsqrt %147 : vector<16x1xf32>
    %149 = vector.broadcast %148 : vector<16x1xf32> to vector<16x32xf32>
    %150 = arith.mulf %145, %149 : vector<16x32xf32>
    %c0_73 = arith.constant 0 : index
    %c0_74 = arith.constant 0 : index
    %c0_75 = arith.constant 0 : index
    %151 = vector.load %arg16[%c0_73, %c0_74, %c0_75] : memref<1x1x32xf32, #tpu.memory_space<vmem>>, vector<1x1x32xf32>
    %152 = vector.shape_cast %151 : vector<1x1x32xf32> to vector<1x32xf32>
    %153 = vector.broadcast %152 : vector<1x32xf32> to vector<16x32xf32>
    %154 = arith.mulf %150, %153 : vector<16x32xf32>
    %c0_76 = arith.constant 0 : index
    %c0_77 = arith.constant 0 : index
    %c0_78 = arith.constant 0 : index
    %155 = vector.load %arg17[%c0_76, %c0_77, %c0_78] : memref<1x1x32xf32, #tpu.memory_space<vmem>>, vector<1x1x32xf32>
    %156 = vector.shape_cast %155 : vector<1x1x32xf32> to vector<1x32xf32>
    %157 = vector.broadcast %156 : vector<1x32xf32> to vector<16x32xf32>
    %158 = arith.addf %154, %157 : vector<16x32xf32>
    %c0_79 = arith.constant 0 : index
    %c0_80 = arith.constant 0 : index
    %159 = vector.load %arg19[%c0_79, %c0_80] : memref<16x32xf32, #tpu.memory_space<vmem>>, vector<16x32xf32>
    tpu.vector_store %arg19[%c0_79, %c0_80], %158 {strides = array<i32>} : memref<16x32xf32, #tpu.memory_space<vmem>>, vector<16x32xf32>,
    %c1_i32 = arith.constant 1 : i32
    %160 = arith.cmpi eq, %arg0, %c1_i32 : i32
    %161 = arith.extui %160 : i1 to i32
    %c0_i32_81 = arith.constant 0 : i32
    %162 = arith.cmpi ne, %161, %c0_i32_81 : i32
    scf.if %162 {
      %cst_82 = arith.constant 0.000000e+00 : f32
      %163 = vector.broadcast %cst_82 : f32 to vector<16x96xf32>
      %164 = tpu.concatenate %158, %163 in 1 : vector<16x32xf32>, vector<16x96xf32> -> vector<16x128xf32>
      %c0_83 = arith.constant 0 : index
      %c0_84 = arith.constant 0 : index
      %165 = vector.load %arg18[%c0_83, %c0_84] : memref<16x128xf32, #tpu.memory_space<vmem>>, vector<16x128xf32>
      tpu.vector_store %arg18[%c0_83, %c0_84], %164 {strides = array<i32>} : memref<16x128xf32, #tpu.memory_space<vmem>>, vector<16x128xf32>,
    } else {
    }
    return
  }
  func.func @transform_0(%arg0: i32) -> (i32, i32) {
    %c0_i32 = arith.constant 0 : i32
    %c0_i32_0 = arith.constant 0 : i32
    %c0_i32_1 = arith.constant 0 : i32
    return %c0_i32, %c0_i32_0 : i32, i32
  }
  func.func @transform_1(%arg0: i32) -> (i32, i32, i32, i32) {
    %c0_i32 = arith.constant 0 : i32
    %c0_i32_0 = arith.constant 0 : i32
    %c0_i32_1 = arith.constant 0 : i32
    %c0_i32_2 = arith.constant 0 : i32
    return %arg0, %c0_i32, %c0_i32_0, %c0_i32_1 : i32, i32, i32, i32
  }
  func.func @transform_2(%arg0: i32) -> (i32, i32, i32, i32) {
    %c0_i32 = arith.constant 0 : i32
    %c0_i32_0 = arith.constant 0 : i32
    %c0_i32_1 = arith.constant 0 : i32
    %c0_i32_2 = arith.constant 0 : i32
    return %arg0, %c0_i32, %c0_i32_0, %c0_i32_1 : i32, i32, i32, i32
  }
  func.func @transform_3(%arg0: i32) -> (i32, i32, i32, i32) {
    %c0_i32 = arith.constant 0 : i32
    %c0_i32_0 = arith.constant 0 : i32
    %c0_i32_1 = arith.constant 0 : i32
    %c0_i32_2 = arith.constant 0 : i32
    return %arg0, %c0_i32, %c0_i32_0, %c0_i32_1 : i32, i32, i32, i32
  }
  func.func @transform_4(%arg0: i32) -> (i32, i32, i32, i32) {
    %c0_i32 = arith.constant 0 : i32
    %c0_i32_0 = arith.constant 0 : i32
    %c0_i32_1 = arith.constant 0 : i32
    %c0_i32_2 = arith.constant 0 : i32
    return %arg0, %c0_i32, %c0_i32_0, %c0_i32_1 : i32, i32, i32, i32
  }
  func.func @transform_5(%arg0: i32) -> (i32, i32, i32, i32) {
    %c0_i32 = arith.constant 0 : i32
    %c0_i32_0 = arith.constant 0 : i32
    %c0_i32_1 = arith.constant 0 : i32
    %c0_i32_2 = arith.constant 0 : i32
    return %arg0, %c0_i32, %c0_i32_0, %c0_i32_1 : i32, i32, i32, i32
  }
  func.func @transform_6(%arg0: i32) -> (i32, i32, i32, i32) {
    %c0_i32 = arith.constant 0 : i32
    %c0_i32_0 = arith.constant 0 : i32
    %c0_i32_1 = arith.constant 0 : i32
    %c0_i32_2 = arith.constant 0 : i32
    return %arg0, %c0_i32, %c0_i32_0, %c0_i32_1 : i32, i32, i32, i32
  }
  func.func @transform_7(%arg0: i32) -> (i32, i32, i32, i32) {
    %c0_i32 = arith.constant 0 : i32
    %c0_i32_0 = arith.constant 0 : i32
    %c0_i32_1 = arith.constant 0 : i32
    %c0_i32_2 = arith.constant 0 : i32
    return %arg0, %c0_i32, %c0_i32_0, %c0_i32_1 : i32, i32, i32, i32
  }
  func.func @transform_8(%arg0: i32) -> (i32, i32, i32) {
    %c0_i32 = arith.constant 0 : i32
    %c0_i32_0 = arith.constant 0 : i32
    %c0_i32_1 = arith.constant 0 : i32
    return %arg0, %c0_i32, %c0_i32_0 : i32, i32, i32
  }
  func.func @transform_9(%arg0: i32) -> (i32, i32, i32) {
    %c0_i32 = arith.constant 0 : i32
    %c0_i32_0 = arith.constant 0 : i32
    %c0_i32_1 = arith.constant 0 : i32
    return %arg0, %c0_i32, %c0_i32_0 : i32, i32, i32
  }
  func.func @transform_10(%arg0: i32) -> (i32, i32, i32) {
    %c0_i32 = arith.constant 0 : i32
    %c0_i32_0 = arith.constant 0 : i32
    %c0_i32_1 = arith.constant 0 : i32
    return %arg0, %c0_i32, %c0_i32_0 : i32, i32, i32
  }
  func.func @transform_11(%arg0: i32) -> (i32, i32, i32) {
    %c0_i32 = arith.constant 0 : i32
    %c0_i32_0 = arith.constant 0 : i32
    %c0_i32_1 = arith.constant 0 : i32
    return %arg0, %c0_i32, %c0_i32_0 : i32, i32, i32
  }
  func.func @transform_12(%arg0: i32) -> (i32, i32, i32) {
    %c0_i32 = arith.constant 0 : i32
    %c0_i32_0 = arith.constant 0 : i32
    %c0_i32_1 = arith.constant 0 : i32
    return %arg0, %c0_i32, %c0_i32_0 : i32, i32, i32
  }
  func.func @transform_13(%arg0: i32) -> (i32, i32, i32) {
    %c0_i32 = arith.constant 0 : i32
    %c0_i32_0 = arith.constant 0 : i32
    %c0_i32_1 = arith.constant 0 : i32
    return %arg0, %c0_i32, %c0_i32_0 : i32, i32, i32
  }
  func.func @transform_14(%arg0: i32) -> (i32, i32, i32) {
    %c0_i32 = arith.constant 0 : i32
    %c0_i32_0 = arith.constant 0 : i32
    %c0_i32_1 = arith.constant 0 : i32
    return %arg0, %c0_i32, %c0_i32_0 : i32, i32, i32
  }
  func.func @transform_15(%arg0: i32) -> (i32, i32, i32) {
    %c0_i32 = arith.constant 0 : i32
    %c0_i32_0 = arith.constant 0 : i32
    %c0_i32_1 = arith.constant 0 : i32
    return %arg0, %c0_i32, %c0_i32_0 : i32, i32, i32
  }
  func.func @transform_16(%arg0: i32) -> (i32, i32, i32) {
    %c0_i32 = arith.constant 0 : i32
    %c0_i32_0 = arith.constant 0 : i32
    %c0_i32_1 = arith.constant 0 : i32
    return %arg0, %c0_i32, %c0_i32_0 : i32, i32, i32
  }
  func.func @transform_17(%arg0: i32) -> (i32, i32) {
    %c0_i32 = arith.constant 0 : i32
    %c0_i32_0 = arith.constant 0 : i32
    %c0_i32_1 = arith.constant 0 : i32
    return %c0_i32, %c0_i32_0 : i32, i32
  }
}

</mosaic_0001>

<llo_original>
// kernel: tpu_custom_call.1
$region0: #{tpu_custom_call.1}
  #allocation0 [shape = 'u32[]', space=smem, size = 0x4, offset = 0x4, fixed_abs, tag = 'smem constant byte address 0x4 - core index']
  #allocation1 [shape = 'u32[72,128]{1,0:T(1,128)}', space=vmem, size = 0x9000, scoped, tag = 'internal scratch']
  #allocation2 [shape = 'f32[16,32]{1,0:T(8,128)}', space=vmem, size = 0x2000, scoped, tag = 'scratch operand']
  %s0 = inlined_call_operand.vmem [shape: f32[16,32], index: 0, kind: input, shape index: {}]
  %s1 = inlined_call_operand.vmem [shape: bf16[2,4,32,8], index: 1, kind: input, shape index: {}]
  %s2 = inlined_call_operand.vmem [shape: f32[2,4,1,8], index: 2, kind: input, shape index: {}]
  %s3 = inlined_call_operand.vmem [shape: bf16[2,4,32,8], index: 3, kind: input, shape index: {}]
  %s4 = inlined_call_operand.vmem [shape: f32[2,4,1,8], index: 4, kind: input, shape index: {}]
  %s5 = inlined_call_operand.vmem [shape: bf16[2,4,32,8], index: 5, kind: input, shape index: {}]
  %s6 = inlined_call_operand.vmem [shape: f32[2,4,1,8], index: 6, kind: input, shape index: {}]
  %s7 = inlined_call_operand.vmem [shape: bf16[2,4,8,32], index: 7, kind: input, shape index: {}]
  %s8 = inlined_call_operand.vmem [shape: f32[2,1,32], index: 8, kind: input, shape index: {}]
  %s9 = inlined_call_operand.vmem [shape: f32[2,1,32], index: 9, kind: input, shape index: {}]
  %s10 = inlined_call_operand.vmem [shape: f32[2,1,32], index: 10, kind: input, shape index: {}]
  %s11 = inlined_call_operand.vmem [shape: bf16[2,32,64], index: 11, kind: input, shape index: {}]
  %s12 = inlined_call_operand.vmem [shape: f32[2,1,64], index: 12, kind: input, shape index: {}]
  %s13 = inlined_call_operand.vmem [shape: bf16[2,64,32], index: 13, kind: input, shape index: {}]
  %s14 = inlined_call_operand.vmem [shape: f32[2,1,32], index: 14, kind: input, shape index: {}]
  %s15 = inlined_call_operand.vmem [shape: f32[2,1,32], index: 15, kind: input, shape index: {}]
  %s16 = inlined_call_operand.vmem [shape: f32[2,1,32], index: 16, kind: input, shape index: {}]
  %s17 = inlined_call_operand.hbm [shape: f32[16,128], index: 17, kind: output, shape index: {}]
  %s18 = sld [smem:[#allocation0]]
  $region109: #{tpu_custom_call.1} parent=0
    _
  %s20 = ssub.s32 1, %s18
  %s21 = scalar_select 0, %s20, %s18
  $region1: #{tpu_custom_call.1} parent=0
    #allocation3 [shape = 'u8[8192]{0}', space=vmem, size = 0x2000, scoped, tag = 'output window, operand 0, single buffered']
    #allocation4 [shape = 's32[2]{0}', space=sflag, size = 0x8, scoped, tag = 'scoped memory for tpu_custom_call.1']
    %22 = vsyncpa [#allocation4], 0
    loop: start=0, step=1, limit=4
    $region2: #{tpu_custom_call.1} parent=1 // loop_pre_header
      _
    $region3: #{tpu_custom_call.1} parent=1 // loop_header
      %s24 = sphi 0, %s28
      %p25 = scmp.ge.s32.totalorder %s24, 4
      %s32 = sphi 0, %s32
      %s34 = sphi 0, %s32
      %s35 = sphi 0, %s34
      %s49 = sphi 0, %s35
      %s55 = sphi 0, %s57
      %s58 = sphi 0, %s55
      %s59 = sphi 0, %s58
      %s75 = sphi 0, %s59
      %s81 = sphi 0, %s83
      %s84 = sphi 0, %s81
      %s85 = sphi 0, %s84
      %s101 = sphi 0, %s85
      %s107 = sphi 0, %s109
      %s110 = sphi 0, %s107
      %s111 = sphi 0, %s110
      %s127 = sphi 0, %s111
      %s133 = sphi 0, %s135
      %s136 = sphi 0, %s133
      %s137 = sphi 0, %s136
      %s153 = sphi 0, %s137
      %s159 = sphi 0, %s161
      %s162 = sphi 0, %s159
      %s163 = sphi 0, %s162
      %s179 = sphi 0, %s163
      %s185 = sphi 0, %s187
      %s188 = sphi 0, %s185
      %s189 = sphi 0, %s188
      %s205 = sphi 0, %s189
      %s211 = sphi 0, %s213
      %s214 = sphi 0, %s211
      %s215 = sphi 0, %s214
      %s231 = sphi 0, %s215
      %s237 = sphi 0, %s239
      %s240 = sphi 0, %s237
      %s241 = sphi 0, %s240
      %s257 = sphi 0, %s241
      %s263 = sphi 0, %s265
      %s266 = sphi 0, %s263
      %s267 = sphi 0, %s266
      %s283 = sphi 0, %s267
      %s289 = sphi 0, %s291
      %s292 = sphi 0, %s289
      %s293 = sphi 0, %s292
      %s309 = sphi 0, %s293
      %s315 = sphi 0, %s317
      %s318 = sphi 0, %s315
      %s319 = sphi 0, %s318
      %s335 = sphi 0, %s319
      %s341 = sphi 0, %s343
      %s344 = sphi 0, %s341
      %s345 = sphi 0, %s344
      %s361 = sphi 0, %s345
      %s367 = sphi 0, %s369
      %s370 = sphi 0, %s367
      %s371 = sphi 0, %s370
      %s387 = sphi 0, %s371
      %s393 = sphi 0, %s395
      %s396 = sphi 0, %s393
      %s397 = sphi 0, %s396
      %s413 = sphi 0, %s397
      %s419 = sphi 0, %s421
      %s422 = sphi 0, %s419
      %s423 = sphi 0, %s422
      %s439 = sphi 0, %s423
      %s445 = sphi 0, %s447
      %s448 = sphi 0, %s445
      %s449 = sphi 0, %s448
      %s465 = sphi 0, %s449
      %s469 = sphi 0, %s469
      %s471 = sphi 0, %s469
      %s472 = sphi 0, %s471
      %s486 = sphi 0, %s472
    $region4: #{tpu_custom_call.1} parent=1 // loop_header_branch
      %27 = sbr.rel (%p25) target = $region8
    $region5: #{tpu_custom_call.1} parent=1 // loop_body
      %s29 = ssub.s32 %s24, 1
      %s30 = ssub.s32 %s24, 2
      %s31 = sadd.s32 %s24, 1
      %s33 = sadd.s32 %s32, 1
      %p36 = scmp.eq.s32.totalorder %s24, 1
      %p37 = scmp.ne.s32.totalorder %s32, %s34
      %p38 = scmp.eq.s32.totalorder %s24, 0
      %p39 = por %p37, %p38
      %p40 = scmp.ne.s32.totalorder %s32, %s34
      %p41 = scmp.eq.s32.totalorder %s29, 1
      %p42 = por %p40, %p41
      %p43 = scmp.ne.s32.totalorder %s34, %s35
      %p44 = scmp.eq.s32.totalorder %s29, 0
      %p45 = por %p43, %p44
      %p46 = scmp.ne.s32.totalorder %s34, %s35
      %p47 = scmp.eq.s32.totalorder %s30, 1
      %p48 = por %p46, %p47
      %p50 = scmp.ne.s32.totalorder %s35, %s49
      %p51 = scmp.eq.s32.totalorder %s30, 0
      %p52 = por %p50, %p51
      %s53 = ssub.s32 %s24, %s31
      %p54 = scmp.eq.s32.totalorder %s53, 0
      %s56 = sadd.s32 %s55, 1
      %s57 = scalar_select %p54, %s55, %s56
      %p60 = pneg %p54
      %p61 = scmp.eq.s32.totalorder %s24, 1
      %p62 = por %p60, %p61
      %p63 = scmp.ne.s32.totalorder %s55, %s58
      %p64 = scmp.eq.s32.totalorder %s24, 0
      %p65 = por %p63, %p64
      %p66 = scmp.ne.s32.totalorder %s55, %s58
      %p67 = scmp.eq.s32.totalorder %s29, 1
      %p68 = por %p66, %p67
      %p69 = scmp.ne.s32.totalorder %s58, %s59
      %p70 = scmp.eq.s32.totalorder %s29, 0
      %p71 = por %p69, %p70
      %p72 = scmp.ne.s32.totalorder %s58, %s59
      %p73 = scmp.eq.s32.totalorder %s30, 1
      %p74 = por %p72, %p73
      %p76 = scmp.ne.s32.totalorder %s59, %s75
      %p77 = scmp.eq.s32.totalorder %s30, 0
      %p78 = por %p76, %p77
      %s79 = ssub.s32 %s24, %s31
      %p80 = scmp.eq.s32.totalorder %s79, 0
      %s82 = sadd.s32 %s81, 1
      %s83 = scalar_select %p80, %s81, %s82
      %p86 = pneg %p80
      %p87 = scmp.eq.s32.totalorder %s24, 1
      %p88 = por %p86, %p87
      %p89 = scmp.ne.s32.totalorder %s81, %s84
      %p90 = scmp.eq.s32.totalorder %s24, 0
      %p91 = por %p89, %p90
      %p92 = scmp.ne.s32.totalorder %s81, %s84
      %p93 = scmp.eq.s32.totalorder %s29, 1
      %p94 = por %p92, %p93
      %p95 = scmp.ne.s32.totalorder %s84, %s85
      %p96 = scmp.eq.s32.totalorder %s29, 0
      %p97 = por %p95, %p96
      %p98 = scmp.ne.s32.totalorder %s84, %s85
      %p99 = scmp.eq.s32.totalorder %s30, 1
      %p100 = por %p98, %p99
      %p102 = scmp.ne.s32.totalorder %s85, %s101
      %p103 = scmp.eq.s32.totalorder %s30, 0
      %p104 = por %p102, %p103
      %s105 = ssub.s32 %s24, %s31
      %p106 = scmp.eq.s32.totalorder %s105, 0
      %s108 = sadd.s32 %s107, 1
      %s109 = scalar_select %p106, %s107, %s108
      %p112 = pneg %p106
      %p113 = scmp.eq.s32.totalorder %s24, 1
      %p114 = por %p112, %p113
      %p115 = scmp.ne.s32.totalorder %s107, %s110
      %p116 = scmp.eq.s32.totalorder %s24, 0
      %p117 = por %p115, %p116
      %p118 = scmp.ne.s32.totalorder %s107, %s110
      %p119 = scmp.eq.s32.totalorder %s29, 1
      %p120 = por %p118, %p119
      %p121 = scmp.ne.s32.totalorder %s110, %s111
      %p122 = scmp.eq.s32.totalorder %s29, 0
      %p123 = por %p121, %p122
      %p124 = scmp.ne.s32.totalorder %s110, %s111
      %p125 = scmp.eq.s32.totalorder %s30, 1
      %p126 = por %p124, %p125
      %p128 = scmp.ne.s32.totalorder %s111, %s127
      %p129 = scmp.eq.s32.totalorder %s30, 0
      %p130 = por %p128, %p129
      %s131 = ssub.s32 %s24, %s31
      %p132 = scmp.eq.s32.totalorder %s131, 0
      %s134 = sadd.s32 %s133, 1
      %s135 = scalar_select %p132, %s133, %s134
      %p138 = pneg %p132
      %p139 = scmp.eq.s32.totalorder %s24, 1
      %p140 = por %p138, %p139
      %p141 = scmp.ne.s32.totalorder %s133, %s136
      %p142 = scmp.eq.s32.totalorder %s24, 0
      %p143 = por %p141, %p142
      %p144 = scmp.ne.s32.totalorder %s133, %s136
      %p145 = scmp.eq.s32.totalorder %s29, 1
      %p146 = por %p144, %p145
      %p147 = scmp.ne.s32.totalorder %s136, %s137
      %p148 = scmp.eq.s32.totalorder %s29, 0
      %p149 = por %p147, %p148
      %p150 = scmp.ne.s32.totalorder %s136, %s137
      %p151 = scmp.eq.s32.totalorder %s30, 1
      %p152 = por %p150, %p151
      %p154 = scmp.ne.s32.totalorder %s137, %s153
      %p155 = scmp.eq.s32.totalorder %s30, 0
      %p156 = por %p154, %p155
      %s157 = ssub.s32 %s24, %s31
      %p158 = scmp.eq.s32.totalorder %s157, 0
      %s160 = sadd.s32 %s159, 1
      %s161 = scalar_select %p158, %s159, %s160
      %p164 = pneg %p158
      %p165 = scmp.eq.s32.totalorder %s24, 1
      %p166 = por %p164, %p165
      %p167 = scmp.ne.s32.totalorder %s159, %s162
      %p168 = scmp.eq.s32.totalorder %s24, 0
      %p169 = por %p167, %p168
      %p170 = scmp.ne.s32.totalorder %s159, %s162
      %p171 = scmp.eq.s32.totalorder %s29, 1
      %p172 = por %p170, %p171
      %p173 = scmp.ne.s32.totalorder %s162, %s163
      %p174 = scmp.eq.s32.totalorder %s29, 0
      %p175 = por %p173, %p174
      %p176 = scmp.ne.s32.totalorder %s162, %s163
      %p177 = scmp.eq.s32.totalorder %s30, 1
      %p178 = por %p176, %p177
      %p180 = scmp.ne.s32.totalorder %s163, %s179
      %p181 = scmp.eq.s32.totalorder %s30, 0
      %p182 = por %p180, %p181
      %s183 = ssub.s32 %s24, %s31
      %p184 = scmp.eq.s32.totalorder %s183, 0
      %s186 = sadd.s32 %s185, 1
      %s187 = scalar_select %p184, %s185, %s186
      %p190 = pneg %p184
      %p191 = scmp.eq.s32.totalorder %s24, 1
      %p192 = por %p190, %p191
      %p193 = scmp.ne.s32.totalorder %s185, %s188
      %p194 = scmp.eq.s32.totalorder %s24, 0
      %p195 = por %p193, %p194
      %p196 = scmp.ne.s32.totalorder %s185, %s188
      %p197 = scmp.eq.s32.totalorder %s29, 1
      %p198 = por %p196, %p197
      %p199 = scmp.ne.s32.totalorder %s188, %s189
      %p200 = scmp.eq.s32.totalorder %s29, 0
      %p201 = por %p199, %p200
      %p202 = scmp.ne.s32.totalorder %s188, %s189
      %p203 = scmp.eq.s32.totalorder %s30, 1
      %p204 = por %p202, %p203
      %p206 = scmp.ne.s32.totalorder %s189, %s205
      %p207 = scmp.eq.s32.totalorder %s30, 0
      %p208 = por %p206, %p207
      %s209 = ssub.s32 %s24, %s31
      %p210 = scmp.eq.s32.totalorder %s209, 0
      %s212 = sadd.s32 %s211, 1
      %s213 = scalar_select %p210, %s211, %s212
      %p216 = pneg %p210
      %p217 = scmp.eq.s32.totalorder %s24, 1
      %p218 = por %p216, %p217
      %p219 = scmp.ne.s32.totalorder %s211, %s214
      %p220 = scmp.eq.s32.totalorder %s24, 0
      %p221 = por %p219, %p220
      %p222 = scmp.ne.s32.totalorder %s211, %s214
      %p223 = scmp.eq.s32.totalorder %s29, 1
      %p224 = por %p222, %p223
      %p225 = scmp.ne.s32.totalorder %s214, %s215
      %p226 = scmp.eq.s32.totalorder %s29, 0
      %p227 = por %p225, %p226
      %p228 = scmp.ne.s32.totalorder %s214, %s215
      %p229 = scmp.eq.s32.totalorder %s30, 1
      %p230 = por %p228, %p229
      %p232 = scmp.ne.s32.totalorder %s215, %s231
      %p233 = scmp.eq.s32.totalorder %s30, 0
      %p234 = por %p232, %p233
      %s235 = ssub.s32 %s24, %s31
      %p236 = scmp.eq.s32.totalorder %s235, 0
      %s238 = sadd.s32 %s237, 1
      %s239 = scalar_select %p236, %s237, %s238
      %p242 = pneg %p236
      %p243 = scmp.eq.s32.totalorder %s24, 1
      %p244 = por %p242, %p243
      %p245 = scmp.ne.s32.totalorder %s237, %s240
      %p246 = scmp.eq.s32.totalorder %s24, 0
      %p247 = por %p245, %p246
      %p248 = scmp.ne.s32.totalorder %s237, %s240
      %p249 = scmp.eq.s32.totalorder %s29, 1
      %p250 = por %p248, %p249
      %p251 = scmp.ne.s32.totalorder %s240, %s241
      %p252 = scmp.eq.s32.totalorder %s29, 0
      %p253 = por %p251, %p252
      %p254 = scmp.ne.s32.totalorder %s240, %s241
      %p255 = scmp.eq.s32.totalorder %s30, 1
      %p256 = por %p254, %p255
      %p258 = scmp.ne.s32.totalorder %s241, %s257
      %p259 = scmp.eq.s32.totalorder %s30, 0
      %p260 = por %p258, %p259
      %s261 = ssub.s32 %s24, %s31
      %p262 = scmp.eq.s32.totalorder %s261, 0
      %s264 = sadd.s32 %s263, 1
      %s265 = scalar_select %p262, %s263, %s264
      %p268 = pneg %p262
      %p269 = scmp.eq.s32.totalorder %s24, 1
      %p270 = por %p268, %p269
      %p271 = scmp.ne.s32.totalorder %s263, %s266
      %p272 = scmp.eq.s32.totalorder %s24, 0
      %p273 = por %p271, %p272
      %p274 = scmp.ne.s32.totalorder %s263, %s266
      %p275 = scmp.eq.s32.totalorder %s29, 1
      %p276 = por %p274, %p275
      %p277 = scmp.ne.s32.totalorder %s266, %s267
      %p278 = scmp.eq.s32.totalorder %s29, 0
      %p279 = por %p277, %p278
      %p280 = scmp.ne.s32.totalorder %s266, %s267
      %p281 = scmp.eq.s32.totalorder %s30, 1
      %p282 = por %p280, %p281
      %p284 = scmp.ne.s32.totalorder %s267, %s283
      %p285 = scmp.eq.s32.totalorder %s30, 0
      %p286 = por %p284, %p285
      %s287 = ssub.s32 %s24, %s31
      %p288 = scmp.eq.s32.totalorder %s287, 0
      %s290 = sadd.s32 %s289, 1
      %s291 = scalar_select %p288, %s289, %s290
      %p294 = pneg %p288
      %p295 = scmp.eq.s32.totalorder %s24, 1
      %p296 = por %p294, %p295
      %p297 = scmp.ne.s32.totalorder %s289, %s292
      %p298 = scmp.eq.s32.totalorder %s24, 0
      %p299 = por %p297, %p298
      %p300 = scmp.ne.s32.totalorder %s289, %s292
      %p301 = scmp.eq.s32.totalorder %s29, 1
      %p302 = por %p300, %p301
      %p303 = scmp.ne.s32.totalorder %s292, %s293
      %p304 = scmp.eq.s32.totalorder %s29, 0
      %p305 = por %p303, %p304
      %p306 = scmp.ne.s32.totalorder %s292, %s293
      %p307 = scmp.eq.s32.totalorder %s30, 1
      %p308 = por %p306, %p307
      %p310 = scmp.ne.s32.totalorder %s293, %s309
      %p311 = scmp.eq.s32.totalorder %s30, 0
      %p312 = por %p310, %p311
      %s313 = ssub.s32 %s24, %s31
      %p314 = scmp.eq.s32.totalorder %s313, 0
      %s316 = sadd.s32 %s315, 1
      %s317 = scalar_select %p314, %s315, %s316
      %p320 = pneg %p314
      %p321 = scmp.eq.s32.totalorder %s24, 1
      %p322 = por %p320, %p321
      %p323 = scmp.ne.s32.totalorder %s315, %s318
      %p324 = scmp.eq.s32.totalorder %s24, 0
      %p325 = por %p323, %p324
      %p326 = scmp.ne.s32.totalorder %s315, %s318
      %p327 = scmp.eq.s32.totalorder %s29, 1
      %p328 = por %p326, %p327
      %p329 = scmp.ne.s32.totalorder %s318, %s319
      %p330 = scmp.eq.s32.totalorder %s29, 0
      %p331 = por %p329, %p330
      %p332 = scmp.ne.s32.totalorder %s318, %s319
      %p333 = scmp.eq.s32.totalorder %s30, 1
      %p334 = por %p332, %p333
      %p336 = scmp.ne.s32.totalorder %s319, %s335
      %p337 = scmp.eq.s32.totalorder %s30, 0
      %p338 = por %p336, %p337
      %s339 = ssub.s32 %s24, %s31
      %p340 = scmp.eq.s32.totalorder %s339, 0
      %s342 = sadd.s32 %s341, 1
      %s343 = scalar_select %p340, %s341, %s342
      %p346 = pneg %p340
      %p347 = scmp.eq.s32.totalorder %s24, 1
      %p348 = por %p346, %p347
      %p349 = scmp.ne.s32.totalorder %s341, %s344
      %p350 = scmp.eq.s32.totalorder %s24, 0
      %p351 = por %p349, %p350
      %p352 = scmp.ne.s32.totalorder %s341, %s344
      %p353 = scmp.eq.s32.totalorder %s29, 1
      %p354 = por %p352, %p353
      %p355 = scmp.ne.s32.totalorder %s344, %s345
      %p356 = scmp.eq.s32.totalorder %s29, 0
      %p357 = por %p355, %p356
      %p358 = scmp.ne.s32.totalorder %s344, %s345
      %p359 = scmp.eq.s32.totalorder %s30, 1
      %p360 = por %p358, %p359
      %p362 = scmp.ne.s32.totalorder %s345, %s361
      %p363 = scmp.eq.s32.totalorder %s30, 0
      %p364 = por %p362, %p363
      %s365 = ssub.s32 %s24, %s31
      %p366 = scmp.eq.s32.totalorder %s365, 0
      %s368 = sadd.s32 %s367, 1
      %s369 = scalar_select %p366, %s367, %s368
      %p372 = pneg %p366
      %p373 = scmp.eq.s32.totalorder %s24, 1
      %p374 = por %p372, %p373
      %p375 = scmp.ne.s32.totalorder %s367, %s370
      %p376 = scmp.eq.s32.totalorder %s24, 0
      %p377 = por %p375, %p376
      %p378 = scmp.ne.s32.totalorder %s367, %s370
      %p379 = scmp.eq.s32.totalorder %s29, 1
      %p380 = por %p378, %p379
      %p381 = scmp.ne.s32.totalorder %s370, %s371
      %p382 = scmp.eq.s32.totalorder %s29, 0
      %p383 = por %p381, %p382
      %p384 = scmp.ne.s32.totalorder %s370, %s371
      %p385 = scmp.eq.s32.totalorder %s30, 1
      %p386 = por %p384, %p385
      %p388 = scmp.ne.s32.totalorder %s371, %s387
      %p389 = scmp.eq.s32.totalorder %s30, 0
      %p390 = por %p388, %p389
      %s391 = ssub.s32 %s24, %s31
      %p392 = scmp.eq.s32.totalorder %s391, 0
      %s394 = sadd.s32 %s393, 1
      %s395 = scalar_select %p392, %s393, %s394
      %p398 = pneg %p392
      %p399 = scmp.eq.s32.totalorder %s24, 1
      %p400 = por %p398, %p399
      %p401 = scmp.ne.s32.totalorder %s393, %s396
      %p402 = scmp.eq.s32.totalorder %s24, 0
      %p403 = por %p401, %p402
      %p404 = scmp.ne.s32.totalorder %s393, %s396
      %p405 = scmp.eq.s32.totalorder %s29, 1
      %p406 = por %p404, %p405
      %p407 = scmp.ne.s32.totalorder %s396, %s397
      %p408 = scmp.eq.s32.totalorder %s29, 0
      %p409 = por %p407, %p408
      %p410 = scmp.ne.s32.totalorder %s396, %s397
      %p411 = scmp.eq.s32.totalorder %s30, 1
      %p412 = por %p410, %p411
      %p414 = scmp.ne.s32.totalorder %s397, %s413
      %p415 = scmp.eq.s32.totalorder %s30, 0
      %p416 = por %p414, %p415
      %s417 = ssub.s32 %s24, %s31
      %p418 = scmp.eq.s32.totalorder %s417, 0
      %s420 = sadd.s32 %s419, 1
      %s421 = scalar_select %p418, %s419, %s420
      %p424 = pneg %p418
      %p425 = scmp.eq.s32.totalorder %s24, 1
      %p426 = por %p424, %p425
      %p427 = scmp.ne.s32.totalorder %s419, %s422
      %p428 = scmp.eq.s32.totalorder %s24, 0
      %p429 = por %p427, %p428
      %p430 = scmp.ne.s32.totalorder %s419, %s422
      %p431 = scmp.eq.s32.totalorder %s29, 1
      %p432 = por %p430, %p431
      %p433 = scmp.ne.s32.totalorder %s422, %s423
      %p434 = scmp.eq.s32.totalorder %s29, 0
      %p435 = por %p433, %p434
      %p436 = scmp.ne.s32.totalorder %s422, %s423
      %p437 = scmp.eq.s32.totalorder %s30, 1
      %p438 = por %p436, %p437
      %p440 = scmp.ne.s32.totalorder %s423, %s439
      %p441 = scmp.eq.s32.totalorder %s30, 0
      %p442 = por %p440, %p441
      %s443 = ssub.s32 %s24, %s31
      %p444 = scmp.eq.s32.totalorder %s443, 0
      %s446 = sadd.s32 %s445, 1
      %s447 = scalar_select %p444, %s445, %s446
      %p450 = pneg %p444
      %p451 = scmp.eq.s32.totalorder %s24, 1
      %p452 = por %p450, %p451
      %p453 = scmp.ne.s32.totalorder %s445, %s448
      %p454 = scmp.eq.s32.totalorder %s24, 0
      %p455 = por %p453, %p454
      %p456 = scmp.ne.s32.totalorder %s445, %s448
      %p457 = scmp.eq.s32.totalorder %s29, 1
      %p458 = por %p456, %p457
      %p459 = scmp.ne.s32.totalorder %s448, %s449
      %p460 = scmp.eq.s32.totalorder %s29, 0
      %p461 = por %p459, %p460
      %p462 = scmp.ne.s32.totalorder %s448, %s449
      %p463 = scmp.eq.s32.totalorder %s30, 1
      %p464 = por %p462, %p463
      %p466 = scmp.ne.s32.totalorder %s449, %s465
      %p467 = scmp.eq.s32.totalorder %s30, 0
      %p468 = por %p466, %p467
      %s470 = sadd.s32 %s469, 1
      %p473 = scmp.eq.s32.totalorder %s24, 1
      %p474 = scmp.ne.s32.totalorder %s469, %s471
      %p475 = scmp.eq.s32.totalorder %s24, 0
      %p476 = por %p474, %p475
      %p477 = scmp.ne.s32.totalorder %s469, %s471
      %p478 = scmp.eq.s32.totalorder %s29, 1
      %p479 = por %p477, %p478
      %p480 = scmp.ne.s32.totalorder %s471, %s472
      %p481 = scmp.eq.s32.totalorder %s29, 0
      %p482 = por %p480, %p481
      %p483 = scmp.ne.s32.totalorder %s471, %s472
      %p484 = scmp.eq.s32.totalorder %s30, 1
      %p485 = por %p483, %p484
      %p487 = scmp.ne.s32.totalorder %s472, %s486
      %p488 = scmp.eq.s32.totalorder %s30, 0
      %p489 = por %p487, %p488
      %p490 = scmp.le.s32.totalorder 1, %s24
      %p491 = scmp.lt.s32.totalorder %s24, 3
      %p492 = pnand %p490, %p491
      %p493 = pneg %p492
      // Predicated region
      $region9: #{tpu_custom_call.1} parent=5 // pred_check
        _
      $region10: #{tpu_custom_call.1} parent=5 // pred_check_branch
        %495 = sbr.rel (%p492) target = $region12
      $region11: #{tpu_custom_call.1} parent=5 // pred_region
        %s496 = ssub.s32 %s24, 1
        // Predicated region
        $region13: #{tpu_custom_call.1} parent=11 // pred_check
          %p497 = pneg %p45
        $region14: #{tpu_custom_call.1} parent=11 // pred_check_branch
          %499 = sbr.rel (%p497) target = $region16
        $region15: #{tpu_custom_call.1} parent=11 // pred_region
          _
        $region16: #{tpu_custom_call.1} parent=11 // pred_fallthru
          _
      $region12: #{tpu_custom_call.1} parent=5 // pred_fallthru
        _
      %p500 = scmp.lt.s32.totalorder %s24, 2
      // Predicated region
      $region17: #{tpu_custom_call.1} parent=5 // pred_check
        %p501 = pneg %p500
      $region18: #{tpu_custom_call.1} parent=5 // pred_check_branch
        %503 = sbr.rel (%p501) target = $region20
      $region19: #{tpu_custom_call.1} parent=5 // pred_region
        // Predicated region
        $region21: #{tpu_custom_call.1} parent=19 // pred_check
          %p504 = pneg %p65
        $region22: #{tpu_custom_call.1} parent=19 // pred_check_branch
          %506 = sbr.rel (%p504) target = $region24
        $region23: #{tpu_custom_call.1} parent=19 // pred_region
          %p507 = scmp.lt.s32.totalorder %s24, 1
          %s508 = scalar_select %p507, %s24, 1
          %s509 = smul.addr %s508, 16
          %s510 = smul.addr %s509, 4
          %s511 = scalar_lea.vmem %s1, %s510
        $region24: #{tpu_custom_call.1} parent=19 // pred_fallthru
          _
        // Predicated region
        $region25: #{tpu_custom_call.1} parent=19 // pred_check
          %p512 = pneg %p91
        $region26: #{tpu_custom_call.1} parent=19 // pred_check_branch
          %514 = sbr.rel (%p512) target = $region28
        $region27: #{tpu_custom_call.1} parent=19 // pred_region
          %p515 = scmp.lt.s32.totalorder %s24, 1
          %s516 = scalar_select %p515, %s24, 1
          %s517 = smul.addr %s516, 4
          %s518 = scalar_lea.vmem %s2, %s517
        $region28: #{tpu_custom_call.1} parent=19 // pred_fallthru
          _
        // Predicated region
        $region29: #{tpu_custom_call.1} parent=19 // pred_check
          %p519 = pneg %p117
        $region30: #{tpu_custom_call.1} parent=19 // pred_check_branch
          %521 = sbr.rel (%p519) target = $region32
        $region31: #{tpu_custom_call.1} parent=19 // pred_region
          %p522 = scmp.lt.s32.totalorder %s24, 1
          %s523 = scalar_select %p522, %s24, 1
          %s524 = smul.addr %s523, 16
          %s525 = smul.addr %s524, 4
          %s526 = scalar_lea.vmem %s3, %s525
        $region32: #{tpu_custom_call.1} parent=19 // pred_fallthru
          _
        // Predicated region
        $region33: #{tpu_custom_call.1} parent=19 // pred_check
          %p527 = pneg %p143
        $region34: #{tpu_custom_call.1} parent=19 // pred_check_branch
          %529 = sbr.rel (%p527) target = $region36
        $region35: #{tpu_custom_call.1} parent=19 // pred_region
          %p530 = scmp.lt.s32.totalorder %s24, 1
          %s531 = scalar_select %p530, %s24, 1
          %s532 = smul.addr %s531, 4
          %s533 = scalar_lea.vmem %s4, %s532
        $region36: #{tpu_custom_call.1} parent=19 // pred_fallthru
          _
        // Predicated region
        $region37: #{tpu_custom_call.1} parent=19 // pred_check
          %p534 = pneg %p169
        $region38: #{tpu_custom_call.1} parent=19 // pred_check_branch
          %536 = sbr.rel (%p534) target = $region40
        $region39: #{tpu_custom_call.1} parent=19 // pred_region
          %p537 = scmp.lt.s32.totalorder %s24, 1
          %s538 = scalar_select %p537, %s24, 1
          %s539 = smul.addr %s538, 16
          %s540 = smul.addr %s539, 4
          %s541 = scalar_lea.vmem %s5, %s540
        $region40: #{tpu_custom_call.1} parent=19 // pred_fallthru
          _
        // Predicated region
        $region41: #{tpu_custom_call.1} parent=19 // pred_check
          %p542 = pneg %p195
        $region42: #{tpu_custom_call.1} parent=19 // pred_check_branch
          %544 = sbr.rel (%p542) target = $region44
        $region43: #{tpu_custom_call.1} parent=19 // pred_region
          %p545 = scmp.lt.s32.totalorder %s24, 1
          %s546 = scalar_select %p545, %s24, 1
          %s547 = smul.addr %s546, 4
          %s548 = scalar_lea.vmem %s6, %s547
        $region44: #{tpu_custom_call.1} parent=19 // pred_fallthru
          _
        // Predicated region
        $region45: #{tpu_custom_call.1} parent=19 // pred_check
          %p549 = pneg %p221
        $region46: #{tpu_custom_call.1} parent=19 // pred_check_branch
          %551 = sbr.rel (%p549) target = $region48
        $region47: #{tpu_custom_call.1} parent=19 // pred_region
          %p552 = scmp.lt.s32.totalorder %s24, 1
          %s553 = scalar_select %p552, %s24, 1
          %s554 = smul.addr %s553, 4
          %s555 = smul.addr %s554, 4
          %s556 = scalar_lea.vmem %s7, %s555
        $region48: #{tpu_custom_call.1} parent=19 // pred_fallthru
          _
        // Predicated region
        $region49: #{tpu_custom_call.1} parent=19 // pred_check
          %p557 = pneg %p247
        $region50: #{tpu_custom_call.1} parent=19 // pred_check_branch
          %559 = sbr.rel (%p557) target = $region52
        $region51: #{tpu_custom_call.1} parent=19 // pred_region
          %p560 = scmp.lt.s32.totalorder %s24, 1
          %s561 = scalar_select %p560, %s24, 1
          %s562 = scalar_lea.vmem %s8, %s561
        $region52: #{tpu_custom_call.1} parent=19 // pred_fallthru
          _
        // Predicated region
        $region53: #{tpu_custom_call.1} parent=19 // pred_check
          %p563 = pneg %p273
        $region54: #{tpu_custom_call.1} parent=19 // pred_check_branch
          %565 = sbr.rel (%p563) target = $region56
        $region55: #{tpu_custom_call.1} parent=19 // pred_region
          %p566 = scmp.lt.s32.totalorder %s24, 1
          %s567 = scalar_select %p566, %s24, 1
          %s568 = scalar_lea.vmem %s9, %s567
        $region56: #{tpu_custom_call.1} parent=19 // pred_fallthru
          _
        // Predicated region
        $region57: #{tpu_custom_call.1} parent=19 // pred_check
          %p569 = pneg %p299
        $region58: #{tpu_custom_call.1} parent=19 // pred_check_branch
          %571 = sbr.rel (%p569) target = $region60
        $region59: #{tpu_custom_call.1} parent=19 // pred_region
          %p572 = scmp.lt.s32.totalorder %s24, 1
          %s573 = scalar_select %p572, %s24, 1
          %s574 = scalar_lea.vmem %s10, %s573
        $region60: #{tpu_custom_call.1} parent=19 // pred_fallthru
          _
        // Predicated region
        $region61: #{tpu_custom_call.1} parent=19 // pred_check
          %p575 = pneg %p325
        $region62: #{tpu_custom_call.1} parent=19 // pred_check_branch
          %577 = sbr.rel (%p575) target = $region64
        $region63: #{tpu_custom_call.1} parent=19 // pred_region
          %p578 = scmp.lt.s32.totalorder %s24, 1
          %s579 = scalar_select %p578, %s24, 1
          %s580 = smul.addr %s579, 4
          %s581 = smul.addr %s580, 4
          %s582 = scalar_lea.vmem %s11, %s581
        $region64: #{tpu_custom_call.1} parent=19 // pred_fallthru
          _
        // Predicated region
        $region65: #{tpu_custom_call.1} parent=19 // pred_check
          %p583 = pneg %p351
        $region66: #{tpu_custom_call.1} parent=19 // pred_check_branch
          %585 = sbr.rel (%p583) target = $region68
        $region67: #{tpu_custom_call.1} parent=19 // pred_region
          %p586 = scmp.lt.s32.totalorder %s24, 1
          %s587 = scalar_select %p586, %s24, 1
          %s588 = scalar_lea.vmem %s12, %s587
        $region68: #{tpu_custom_call.1} parent=19 // pred_fallthru
          _
        // Predicated region
        $region69: #{tpu_custom_call.1} parent=19 // pred_check
          %p589 = pneg %p377
        $region70: #{tpu_custom_call.1} parent=19 // pred_check_branch
          %591 = sbr.rel (%p589) target = $region72
        $region71: #{tpu_custom_call.1} parent=19 // pred_region
          %p592 = scmp.lt.s32.totalorder %s24, 1
          %s593 = scalar_select %p592, %s24, 1
          %s594 = smul.addr %s593, 8
          %s595 = smul.addr %s594, 4
          %s596 = scalar_lea.vmem %s13, %s595
        $region72: #{tpu_custom_call.1} parent=19 // pred_fallthru
          _
        // Predicated region
        $region73: #{tpu_custom_call.1} parent=19 // pred_check
          %p597 = pneg %p403
        $region74: #{tpu_custom_call.1} parent=19 // pred_check_branch
          %599 = sbr.rel (%p597) target = $region76
        $region75: #{tpu_custom_call.1} parent=19 // pred_region
          %p600 = scmp.lt.s32.totalorder %s24, 1
          %s601 = scalar_select %p600, %s24, 1
          %s602 = scalar_lea.vmem %s14, %s601
        $region76: #{tpu_custom_call.1} parent=19 // pred_fallthru
          _
        // Predicated region
        $region77: #{tpu_custom_call.1} parent=19 // pred_check
          %p603 = pneg %p429
        $region78: #{tpu_custom_call.1} parent=19 // pred_check_branch
          %605 = sbr.rel (%p603) target = $region80
        $region79: #{tpu_custom_call.1} parent=19 // pred_region
          %p606 = scmp.lt.s32.totalorder %s24, 1
          %s607 = scalar_select %p606, %s24, 1
          %s608 = scalar_lea.vmem %s15, %s607
        $region80: #{tpu_custom_call.1} parent=19 // pred_fallthru
          _
        // Predicated region
        $region81: #{tpu_custom_call.1} parent=19 // pred_check
          %p609 = pneg %p455
        $region82: #{tpu_custom_call.1} parent=19 // pred_check_branch
          %611 = sbr.rel (%p609) target = $region84
        $region83: #{tpu_custom_call.1} parent=19 // pred_region
          %p612 = scmp.lt.s32.totalorder %s24, 1
          %s613 = scalar_select %p612, %s24, 1
          %s614 = scalar_lea.vmem %s16, %s613
        $region84: #{tpu_custom_call.1} parent=19 // pred_fallthru
          _
      $region20: #{tpu_custom_call.1} parent=5 // pred_fallthru
        _
      %p615 = scmp.le.s32.totalorder 1, %s24
      %p616 = scmp.lt.s32.totalorder %s24, 3
      %p617 = pnand %p615, %p616
      %p618 = pneg %p617
      // Predicated region
      $region85: #{tpu_custom_call.1} parent=5 // pred_check
        _
      $region86: #{tpu_custom_call.1} parent=5 // pred_check_branch
        %620 = sbr.rel (%p617) target = $region88
      $region87: #{tpu_custom_call.1} parent=5 // pred_region
        %s621 = ssub.s32 %s24, 1
        %p622 = pneg %p45
        %p623 = pneg %p42
        %p624 = scmp.lt.s32.totalorder %s29, 1
        %s625 = scalar_select %p624, %s29, 1
        %s626 = smul.addr %s625, 16
        %s627 = smul.addr %s626, 4
        %s628 = scalar_lea.vmem %s1, %s627
        %p629 = pneg %p71
        %p630 = pneg %p68
        %p631 = scmp.lt.s32.totalorder %s29, 1
        %s632 = scalar_select %p631, %s29, 1
        %s633 = smul.addr %s632, 4
        %s634 = scalar_lea.vmem %s2, %s633
        %p635 = pneg %p97
        %p636 = pneg %p94
        %p637 = scmp.lt.s32.totalorder %s29, 1
        %s638 = scalar_select %p637, %s29, 1
        %s639 = smul.addr %s638, 16
        %s640 = smul.addr %s639, 4
        %s641 = scalar_lea.vmem %s3, %s640
        %p642 = pneg %p123
        %p643 = pneg %p120
        %p644 = scmp.lt.s32.totalorder %s29, 1
        %s645 = scalar_select %p644, %s29, 1
        %s646 = smul.addr %s645, 4
        %s647 = scalar_lea.vmem %s4, %s646
        %p648 = pneg %p149
        %p649 = pneg %p146
        %p650 = scmp.lt.s32.totalorder %s29, 1
        %s651 = scalar_select %p650, %s29, 1
        %s652 = smul.addr %s651, 16
        %s653 = smul.addr %s652, 4
        %s654 = scalar_lea.vmem %s5, %s653
        %p655 = pneg %p175
        %p656 = pneg %p172
        %p657 = scmp.lt.s32.totalorder %s29, 1
        %s658 = scalar_select %p657, %s29, 1
        %s659 = smul.addr %s658, 4
        %s660 = scalar_lea.vmem %s6, %s659
        %p661 = pneg %p201
        %p662 = pneg %p198
        %p663 = scmp.lt.s32.totalorder %s29, 1
        %s664 = scalar_select %p663, %s29, 1
        %s665 = smul.addr %s664, 4
        %s666 = smul.addr %s665, 4
        %s667 = scalar_lea.vmem %s7, %s666
        %p668 = pneg %p227
        %p669 = pneg %p224
        %p670 = scmp.lt.s32.totalorder %s29, 1
        %s671 = scalar_select %p670, %s29, 1
        %s672 = scalar_lea.vmem %s8, %s671
        %p673 = pneg %p253
        %p674 = pneg %p250
        %p675 = scmp.lt.s32.totalorder %s29, 1
        %s676 = scalar_select %p675, %s29, 1
        %s677 = scalar_lea.vmem %s9, %s676
        %p678 = pneg %p279
        %p679 = pneg %p276
        %p680 = scmp.lt.s32.totalorder %s29, 1
        %s681 = scalar_select %p680, %s29, 1
        %s682 = scalar_lea.vmem %s10, %s681
        %p683 = pneg %p305
        %p684 = pneg %p302
        %p685 = scmp.lt.s32.totalorder %s29, 1
        %s686 = scalar_select %p685, %s29, 1
        %s687 = smul.addr %s686, 4
        %s688 = smul.addr %s687, 4
        %s689 = scalar_lea.vmem %s11, %s688
        %p690 = pneg %p331
        %p691 = pneg %p328
        %p692 = scmp.lt.s32.totalorder %s29, 1
        %s693 = scalar_select %p692, %s29, 1
        %s694 = scalar_lea.vmem %s12, %s693
        %p695 = pneg %p357
        %p696 = pneg %p354
        %p697 = scmp.lt.s32.totalorder %s29, 1
        %s698 = scalar_select %p697, %s29, 1
        %s699 = smul.addr %s698, 8
        %s700 = smul.addr %s699, 4
        %s701 = scalar_lea.vmem %s13, %s700
        %p702 = pneg %p383
        %p703 = pneg %p380
        %p704 = scmp.lt.s32.totalorder %s29, 1
        %s705 = scalar_select %p704, %s29, 1
        %s706 = scalar_lea.vmem %s14, %s705
        %p707 = pneg %p409
        %p708 = pneg %p406
        %p709 = scmp.lt.s32.totalorder %s29, 1
        %s710 = scalar_select %p709, %s29, 1
        %s711 = scalar_lea.vmem %s15, %s710
        %p712 = pneg %p435
        %p713 = pneg %p432
        %p714 = scmp.lt.s32.totalorder %s29, 1
        %s715 = scalar_select %p714, %s29, 1
        %s716 = scalar_lea.vmem %s16, %s715
        %p717 = pneg %p461
        %p718 = pneg %p458
        %p719 = pneg %p482
        %p720 = pneg %p479
        %p721 = scmp.lt.s32.totalorder %s29, 1
        %s722 = scalar_select %p721, %s29, 1
        %s723 = smul.addr %s722, 16
        %s724 = smul.addr %s723, 4
        %s725 = scalar_lea.vmem %s1, %s724
        %p726 = scmp.lt.s32.totalorder %s29, 1
        %s727 = scalar_select %p726, %s29, 1
        %s728 = smul.addr %s727, 4
        %s729 = scalar_lea.vmem %s2, %s728
        %p730 = scmp.lt.s32.totalorder %s29, 1
        %s731 = scalar_select %p730, %s29, 1
        %s732 = smul.addr %s731, 16
        %s733 = smul.addr %s732, 4
        %s734 = scalar_lea.vmem %s3, %s733
        %p735 = scmp.lt.s32.totalorder %s29, 1
        %s736 = scalar_select %p735, %s29, 1
        %s737 = smul.addr %s736, 4
        %s738 = scalar_lea.vmem %s4, %s737
        %p739 = scmp.lt.s32.totalorder %s29, 1
        %s740 = scalar_select %p739, %s29, 1
        %s741 = smul.addr %s740, 16
        %s742 = smul.addr %s741, 4
        %s743 = scalar_lea.vmem %s5, %s742
        %p744 = scmp.lt.s32.totalorder %s29, 1
        %s745 = scalar_select %p744, %s29, 1
        %s746 = smul.addr %s745, 4
        %s747 = scalar_lea.vmem %s6, %s746
        %p748 = scmp.lt.s32.totalorder %s29, 1
        %s749 = scalar_select %p748, %s29, 1
        %s750 = smul.addr %s749, 4
        %s751 = smul.addr %s750, 4
        %s752 = scalar_lea.vmem %s7, %s751
        %p753 = scmp.lt.s32.totalorder %s29, 1
        %s754 = scalar_select %p753, %s29, 1
        %s755 = scalar_lea.vmem %s8, %s754
        %p756 = scmp.lt.s32.totalorder %s29, 1
        %s757 = scalar_select %p756, %s29, 1
        %s758 = scalar_lea.vmem %s9, %s757
        %p759 = scmp.lt.s32.totalorder %s29, 1
        %s760 = scalar_select %p759, %s29, 1
        %s761 = scalar_lea.vmem %s10, %s760
        %p762 = scmp.lt.s32.totalorder %s29, 1
        %s763 = scalar_select %p762, %s29, 1
        %s764 = smul.addr %s763, 4
        %s765 = smul.addr %s764, 4
        %s766 = scalar_lea.vmem %s11, %s765
        %p767 = scmp.lt.s32.totalorder %s29, 1
        %s768 = scalar_select %p767, %s29, 1
        %s769 = scalar_lea.vmem %s12, %s768
        %p770 = scmp.lt.s32.totalorder %s29, 1
        %s771 = scalar_select %p770, %s29, 1
        %s772 = smul.addr %s771, 8
        %s773 = smul.addr %s772, 4
        %s774 = scalar_lea.vmem %s13, %s773
        %p775 = scmp.lt.s32.totalorder %s29, 1
        %s776 = scalar_select %p775, %s29, 1
        %s777 = scalar_lea.vmem %s14, %s776
        %p778 = scmp.lt.s32.totalorder %s29, 1
        %s779 = scalar_select %p778, %s29, 1
        %s780 = scalar_lea.vmem %s15, %s779
        %p781 = scmp.lt.s32.totalorder %s29, 1
        %s782 = scalar_select %p781, %s29, 1
        %s783 = scalar_lea.vmem %s16, %s782
        %p785 = scmp.eq.s32.totalorder %s29, 0
        // Predicated region
        $region89: #{tpu_custom_call.1} parent=87 // pred_check
          %p786 = pneg %p785
        $region90: #{tpu_custom_call.1} parent=87 // pred_check_branch
          %788 = sbr.rel (%p786) target = $region92
        $region91: #{tpu_custom_call.1} parent=87 // pred_region
          %v789 = vld [vmem:[%s0] sm:$0xff]
          %v790 = vld [vmem:[%s0 + $0x8] sm:$0xff]
          %vm791 = vcmask 261120
          %792 = vst.msk [vmem:[#allocation2] sm:$0xff] %vm791, %v789
          %793 = vst.msk [vmem:[#allocation2 + $0x8] sm:$0xff] %vm791, %v790
        $region92: #{tpu_custom_call.1} parent=87 // pred_fallthru
          _
        %v794 = vld [vmem:[#allocation2] sm:$0xff]
        %v795 = vld [vmem:[#allocation2 + $0x8] sm:$0xff]
        %v796 = vpack.c.bf16 %v794, %v794
        %v797 = vpack.c.bf16 %v795, %v795
        %v798 = vld [vmem:[%s725] sm:$0xf]
        %v799 = vld [vmem:[%s725 + $0x4] sm:$0xf]
        %v800 = vld [vmem:[%s725 + $0x8] sm:$0xf]
        %v801 = vld [vmem:[%s725 + $0xc] sm:$0xf]
        %v802 = vld [vmem:[%s725 + $0x10] sm:$0xf]
        %v803 = vld [vmem:[%s725 + $0x14] sm:$0xf]
        %v804 = vld [vmem:[%s725 + $0x18] sm:$0xf]
        %v805 = vld [vmem:[%s725 + $0x1c] sm:$0xf]
        %v806 = vld [vmem:[%s725 + $0x20] sm:$0xf]
        %v807 = vld [vmem:[%s725 + $0x24] sm:$0xf]
        %v808 = vld [vmem:[%s725 + $0x28] sm:$0xf]
        %v809 = vld [vmem:[%s725 + $0x2c] sm:$0xf]
        %v810 = vld [vmem:[%s725 + $0x30] sm:$0xf]
        %v811 = vld [vmem:[%s725 + $0x34] sm:$0xf]
        %v812 = vld [vmem:[%s725 + $0x38] sm:$0xf]
        %v813 = vld [vmem:[%s725 + $0x3c] sm:$0xf]
        %v814 = vld [vmem:[%s729] sm:$0x1]
        %v815 = vld [vmem:[%s729 + $0x1] sm:$0x1]
        %v816 = vld [vmem:[%s729 + $0x2] sm:$0x1]
        %v817 = vld [vmem:[%s729 + $0x3] sm:$0x1]
        %v822 = vperm.slane %v814, 0
        %v823 = vperm.slane %v815, 0
        %v824 = vperm.slane %v816, 0
        %v825 = vperm.slane %v817, 0
        %v834 = vunpack.c.l.b16 %v798
        %v835 = vunpack.c.l.b16 %v799
        %v836 = vunpack.c.l.b16 %v800
        %v837 = vunpack.c.l.b16 %v801
        %v838 = vpack.c.b16 %v835, %v834
        %v839 = vpack.c.b16 %v837, %v836
        %vm842 = vcmask 261120
        %v844 = vsel %vm842, %v796, 0
        %846 = vmatpush.bf16.msra.mxu0 0
        %847 = vmatpush.bf16.msra.mxu0 0
        %848 = vmatpush.bf16.msra.mxu0 0
        %849 = vmatpush.bf16.msra.mxu0 0
        %850 = vmatpush.bf16.msra.mxu0 0
        %851 = vmatpush.bf16.msra.mxu0 0
        %852 = vmatpush.bf16.msra.mxu0 %v839
        %853 = vmatpush.bf16.msra.mxu0 %v838
        %854 = vmatmul.bf16.gmra.mxu0 %v844
        %v855 = vpop.f32.mrf.mxu0
        %v856 = vadd.f32 %v822, %v855
        %v857 = vpop.f32.mrf.mxu0
        %858 = vdwg.mxu0
        %v863 = vunpack.c.l.b16 %v802
        %v864 = vunpack.c.l.b16 %v803
        %v865 = vunpack.c.l.b16 %v804
        %v866 = vunpack.c.l.b16 %v805
        %v867 = vpack.c.b16 %v864, %v863
        %v868 = vpack.c.b16 %v866, %v865
        %871 = vmatpush.bf16.msra.mxu0 0
        %872 = vmatpush.bf16.msra.mxu0 0
        %873 = vmatpush.bf16.msra.mxu0 0
        %874 = vmatpush.bf16.msra.mxu0 0
        %875 = vmatpush.bf16.msra.mxu0 0
        %876 = vmatpush.bf16.msra.mxu0 0
        %877 = vmatpush.bf16.msra.mxu0 %v868
        %878 = vmatpush.bf16.msra.mxu0 %v867
        %879 = vmatmul.bf16.gmra.mxu0 %v844
        %v880 = vpop.f32.mrf.mxu0
        %v881 = vadd.f32 %v823, %v880
        %v882 = vpop.f32.mrf.mxu0
        %883 = vdwg.mxu0
        %v888 = vunpack.c.l.b16 %v806
        %v889 = vunpack.c.l.b16 %v807
        %v890 = vunpack.c.l.b16 %v808
        %v891 = vunpack.c.l.b16 %v809
        %v892 = vpack.c.b16 %v889, %v888
        %v893 = vpack.c.b16 %v891, %v890
        %896 = vmatpush.bf16.msra.mxu0 0
        %897 = vmatpush.bf16.msra.mxu0 0
        %898 = vmatpush.bf16.msra.mxu0 0
        %899 = vmatpush.bf16.msra.mxu0 0
        %900 = vmatpush.bf16.msra.mxu0 0
        %901 = vmatpush.bf16.msra.mxu0 0
        %902 = vmatpush.bf16.msra.mxu0 %v893
        %903 = vmatpush.bf16.msra.mxu0 %v892
        %904 = vmatmul.bf16.gmra.mxu0 %v844
        %v905 = vpop.f32.mrf.mxu0
        %v906 = vadd.f32 %v824, %v905
        %v907 = vpop.f32.mrf.mxu0
        %908 = vdwg.mxu0
        %v913 = vunpack.c.l.b16 %v810
        %v914 = vunpack.c.l.b16 %v811
        %v915 = vunpack.c.l.b16 %v812
        %v916 = vunpack.c.l.b16 %v813
        %v917 = vpack.c.b16 %v914, %v913
        %v918 = vpack.c.b16 %v916, %v915
        %921 = vmatpush.bf16.msra.mxu0 0
        %922 = vmatpush.bf16.msra.mxu0 0
        %923 = vmatpush.bf16.msra.mxu0 0
        %924 = vmatpush.bf16.msra.mxu0 0
        %925 = vmatpush.bf16.msra.mxu0 0
        %926 = vmatpush.bf16.msra.mxu0 0
        %927 = vmatpush.bf16.msra.mxu0 %v918
        %928 = vmatpush.bf16.msra.mxu0 %v917
        %929 = vmatmul.bf16.gmra.mxu0 %v844
        %v930 = vpop.f32.mrf.mxu0
        %v931 = vadd.f32 %v825, %v930
        %v932 = vpop.f32.mrf.mxu0
        %933 = vdwg.mxu0
        %v935 = vsel %vm842, %v797, 0
        %937 = vmatpush.bf16.msra.mxu0 0
        %938 = vmatpush.bf16.msra.mxu0 0
        %939 = vmatpush.bf16.msra.mxu0 0
        %940 = vmatpush.bf16.msra.mxu0 0
        %941 = vmatpush.bf16.msra.mxu0 0
        %942 = vmatpush.bf16.msra.mxu0 0
        %943 = vmatpush.bf16.msra.mxu0 %v839
        %944 = vmatpush.bf16.msra.mxu0 %v838
        %945 = vmatmul.bf16.gmra.mxu0 %v935
        %v946 = vpop.f32.mrf.mxu0
        %v947 = vadd.f32 %v822, %v946
        %v948 = vpop.f32.mrf.mxu0
        %949 = vdwg.mxu0
        %950 = vmatpush.bf16.msra.mxu0 0
        %951 = vmatpush.bf16.msra.mxu0 0
        %952 = vmatpush.bf16.msra.mxu0 0
        %953 = vmatpush.bf16.msra.mxu0 0
        %954 = vmatpush.bf16.msra.mxu0 0
        %955 = vmatpush.bf16.msra.mxu0 0
        %956 = vmatpush.bf16.msra.mxu0 %v868
        %957 = vmatpush.bf16.msra.mxu0 %v867
        %958 = vmatmul.bf16.gmra.mxu0 %v935
        %v959 = vpop.f32.mrf.mxu0
        %v960 = vadd.f32 %v823, %v959
        %v961 = vpop.f32.mrf.mxu0
        %962 = vdwg.mxu0
        %963 = vmatpush.bf16.msra.mxu0 0
        %964 = vmatpush.bf16.msra.mxu0 0
        %965 = vmatpush.bf16.msra.mxu0 0
        %966 = vmatpush.bf16.msra.mxu0 0
        %967 = vmatpush.bf16.msra.mxu0 0
        %968 = vmatpush.bf16.msra.mxu0 0
        %969 = vmatpush.bf16.msra.mxu0 %v893
        %970 = vmatpush.bf16.msra.mxu0 %v892
        %971 = vmatmul.bf16.gmra.mxu0 %v935
        %v972 = vpop.f32.mrf.mxu0
        %v973 = vadd.f32 %v824, %v972
        %v974 = vpop.f32.mrf.mxu0
        %975 = vdwg.mxu0
        %976 = vmatpush.bf16.msra.mxu0 0
        %977 = vmatpush.bf16.msra.mxu0 0
        %978 = vmatpush.bf16.msra.mxu0 0
        %979 = vmatpush.bf16.msra.mxu0 0
        %980 = vmatpush.bf16.msra.mxu0 0
        %981 = vmatpush.bf16.msra.mxu0 0
        %982 = vmatpush.bf16.msra.mxu0 %v918
        %983 = vmatpush.bf16.msra.mxu0 %v917
        %984 = vmatmul.bf16.gmra.mxu0 %v935
        %v985 = vpop.f32.mrf.mxu0
        %v986 = vadd.f32 %v825, %v985
        %v987 = vpop.f32.mrf.mxu0
        %988 = vdwg.mxu0
        %v989 = vld [vmem:[%s734] sm:$0xf]
        %v990 = vld [vmem:[%s734 + $0x4] sm:$0xf]
        %v991 = vld [vmem:[%s734 + $0x8] sm:$0xf]
        %v992 = vld [vmem:[%s734 + $0xc] sm:$0xf]
        %v993 = vld [vmem:[%s734 + $0x10] sm:$0xf]
        %v994 = vld [vmem:[%s734 + $0x14] sm:$0xf]
        %v995 = vld [vmem:[%s734 + $0x18] sm:$0xf]
        %v996 = vld [vmem:[%s734 + $0x1c] sm:$0xf]
        %v997 = vld [vmem:[%s734 + $0x20] sm:$0xf]
        %v998 = vld [vmem:[%s734 + $0x24] sm:$0xf]
        %v999 = vld [vmem:[%s734 + $0x28] sm:$0xf]
        %v1000 = vld [vmem:[%s734 + $0x2c] sm:$0xf]
        %v1001 = vld [vmem:[%s734 + $0x30] sm:$0xf]
        %v1002 = vld [vmem:[%s734 + $0x34] sm:$0xf]
        %v1003 = vld [vmem:[%s734 + $0x38] sm:$0xf]
        %v1004 = vld [vmem:[%s734 + $0x3c] sm:$0xf]
        %v1005 = vld [vmem:[%s738] sm:$0x1]
        %v1006 = vld [vmem:[%s738 + $0x1] sm:$0x1]
        %v1007 = vld [vmem:[%s738 + $0x2] sm:$0x1]
        %v1008 = vld [vmem:[%s738 + $0x3] sm:$0x1]
        %v1013 = vperm.slane %v1005, 0
        %v1014 = vperm.slane %v1006, 0
        %v1015 = vperm.slane %v1007, 0
        %v1016 = vperm.slane %v1008, 0
        %v1025 = vunpack.c.l.b16 %v989
        %v1026 = vunpack.c.l.b16 %v990
        %v1027 = vunpack.c.l.b16 %v991
        %v1028 = vunpack.c.l.b16 %v992
        %v1029 = vpack.c.b16 %v1026, %v1025
        %v1030 = vpack.c.b16 %v1028, %v1027
        %1033 = vmatpush.bf16.msra.mxu0 0
        %1034 = vmatpush.bf16.msra.mxu0 0
        %1035 = vmatpush.bf16.msra.mxu0 0
        %1036 = vmatpush.bf16.msra.mxu0 0
        %1037 = vmatpush.bf16.msra.mxu0 0
        %1038 = vmatpush.bf16.msra.mxu0 0
        %1039 = vmatpush.bf16.msra.mxu0 %v1030
        %1040 = vmatpush.bf16.msra.mxu0 %v1029
        %1041 = vmatmul.bf16.gmra.mxu0 %v844
        %v1042 = vpop.f32.mrf.mxu0
        %v1043 = vadd.f32 %v1013, %v1042
        %v1044 = vpop.f32.mrf.mxu0
        %1045 = vdwg.mxu0
        %v1050 = vunpack.c.l.b16 %v993
        %v1051 = vunpack.c.l.b16 %v994
        %v1052 = vunpack.c.l.b16 %v995
        %v1053 = vunpack.c.l.b16 %v996
        %v1054 = vpack.c.b16 %v1051, %v1050
        %v1055 = vpack.c.b16 %v1053, %v1052
        %1058 = vmatpush.bf16.msra.mxu0 0
        %1059 = vmatpush.bf16.msra.mxu0 0
        %1060 = vmatpush.bf16.msra.mxu0 0
        %1061 = vmatpush.bf16.msra.mxu0 0
        %1062 = vmatpush.bf16.msra.mxu0 0
        %1063 = vmatpush.bf16.msra.mxu0 0
        %1064 = vmatpush.bf16.msra.mxu0 %v1055
        %1065 = vmatpush.bf16.msra.mxu0 %v1054
        %1066 = vmatmul.bf16.gmra.mxu0 %v844
        %v1067 = vpop.f32.mrf.mxu0
        %v1068 = vadd.f32 %v1014, %v1067
        %v1069 = vpop.f32.mrf.mxu0
        %1070 = vdwg.mxu0
        %v1075 = vunpack.c.l.b16 %v997
        %v1076 = vunpack.c.l.b16 %v998
        %v1077 = vunpack.c.l.b16 %v999
        %v1078 = vunpack.c.l.b16 %v1000
        %v1079 = vpack.c.b16 %v1076, %v1075
        %v1080 = vpack.c.b16 %v1078, %v1077
        %1083 = vmatpush.bf16.msra.mxu0 0
        %1084 = vmatpush.bf16.msra.mxu0 0
        %1085 = vmatpush.bf16.msra.mxu0 0
        %1086 = vmatpush.bf16.msra.mxu0 0
        %1087 = vmatpush.bf16.msra.mxu0 0
        %1088 = vmatpush.bf16.msra.mxu0 0
        %1089 = vmatpush.bf16.msra.mxu0 %v1080
        %1090 = vmatpush.bf16.msra.mxu0 %v1079
        %1091 = vmatmul.bf16.gmra.mxu0 %v844
        %v1092 = vpop.f32.mrf.mxu0
        %v1093 = vadd.f32 %v1015, %v1092
        %v1094 = vpop.f32.mrf.mxu0
        %1095 = vdwg.mxu0
        %v1100 = vunpack.c.l.b16 %v1001
        %v1101 = vunpack.c.l.b16 %v1002
        %v1102 = vunpack.c.l.b16 %v1003
        %v1103 = vunpack.c.l.b16 %v1004
        %v1104 = vpack.c.b16 %v1101, %v1100
        %v1105 = vpack.c.b16 %v1103, %v1102
        %1108 = vmatpush.bf16.msra.mxu0 0
        %1109 = vmatpush.bf16.msra.mxu0 0
        %1110 = vmatpush.bf16.msra.mxu0 0
        %1111 = vmatpush.bf16.msra.mxu0 0
        %1112 = vmatpush.bf16.msra.mxu0 0
        %1113 = vmatpush.bf16.msra.mxu0 0
        %1114 = vmatpush.bf16.msra.mxu0 %v1105
        %1115 = vmatpush.bf16.msra.mxu0 %v1104
        %1116 = vmatmul.bf16.gmra.mxu0 %v844
        %v1117 = vpop.f32.mrf.mxu0
        %v1118 = vadd.f32 %v1016, %v1117
        %v1119 = vpop.f32.mrf.mxu0
        %1120 = vdwg.mxu0
        %1121 = vmatpush.bf16.msra.mxu0 0
        %1122 = vmatpush.bf16.msra.mxu0 0
        %1123 = vmatpush.bf16.msra.mxu0 0
        %1124 = vmatpush.bf16.msra.mxu0 0
        %1125 = vmatpush.bf16.msra.mxu0 0
        %1126 = vmatpush.bf16.msra.mxu0 0
        %1127 = vmatpush.bf16.msra.mxu0 %v1030
        %1128 = vmatpush.bf16.msra.mxu0 %v1029
        %1129 = vmatmul.bf16.gmra.mxu0 %v935
        %v1130 = vpop.f32.mrf.mxu0
        %v1131 = vadd.f32 %v1013, %v1130
        %v1132 = vpop.f32.mrf.mxu0
        %1133 = vdwg.mxu0
        %1134 = vmatpush.bf16.msra.mxu0 0
        %1135 = vmatpush.bf16.msra.mxu0 0
        %1136 = vmatpush.bf16.msra.mxu0 0
        %1137 = vmatpush.bf16.msra.mxu0 0
        %1138 = vmatpush.bf16.msra.mxu0 0
        %1139 = vmatpush.bf16.msra.mxu0 0
        %1140 = vmatpush.bf16.msra.mxu0 %v1055
        %1141 = vmatpush.bf16.msra.mxu0 %v1054
        %1142 = vmatmul.bf16.gmra.mxu0 %v935
        %v1143 = vpop.f32.mrf.mxu0
        %v1144 = vadd.f32 %v1014, %v1143
        %v1145 = vpop.f32.mrf.mxu0
        %1146 = vdwg.mxu0
        %1147 = vmatpush.bf16.msra.mxu0 0
        %1148 = vmatpush.bf16.msra.mxu0 0
        %1149 = vmatpush.bf16.msra.mxu0 0
        %1150 = vmatpush.bf16.msra.mxu0 0
        %1151 = vmatpush.bf16.msra.mxu0 0
        %1152 = vmatpush.bf16.msra.mxu0 0
        %1153 = vmatpush.bf16.msra.mxu0 %v1080
        %1154 = vmatpush.bf16.msra.mxu0 %v1079
        %1155 = vmatmul.bf16.gmra.mxu0 %v935
        %v1156 = vpop.f32.mrf.mxu0
        %v1157 = vadd.f32 %v1015, %v1156
        %v1158 = vpop.f32.mrf.mxu0
        %1159 = vdwg.mxu0
        %1160 = vmatpush.bf16.msra.mxu0 0
        %1161 = vmatpush.bf16.msra.mxu0 0
        %1162 = vmatpush.bf16.msra.mxu0 0
        %1163 = vmatpush.bf16.msra.mxu0 0
        %1164 = vmatpush.bf16.msra.mxu0 0
        %1165 = vmatpush.bf16.msra.mxu0 0
        %1166 = vmatpush.bf16.msra.mxu0 %v1105
        %1167 = vmatpush.bf16.msra.mxu0 %v1104
        %1168 = vmatmul.bf16.gmra.mxu0 %v935
        %v1169 = vpop.f32.mrf.mxu0
        %v1170 = vadd.f32 %v1016, %v1169
        %v1171 = vpop.f32.mrf.mxu0
        %1172 = vdwg.mxu0
        %v1173 = vld [vmem:[%s743] sm:$0xf]
        %v1174 = vld [vmem:[%s743 + $0x4] sm:$0xf]
        %v1175 = vld [vmem:[%s743 + $0x8] sm:$0xf]
        %v1176 = vld [vmem:[%s743 + $0xc] sm:$0xf]
        %v1177 = vld [vmem:[%s743 + $0x10] sm:$0xf]
        %v1178 = vld [vmem:[%s743 + $0x14] sm:$0xf]
        %v1179 = vld [vmem:[%s743 + $0x18] sm:$0xf]
        %v1180 = vld [vmem:[%s743 + $0x1c] sm:$0xf]
        %v1181 = vld [vmem:[%s743 + $0x20] sm:$0xf]
        %v1182 = vld [vmem:[%s743 + $0x24] sm:$0xf]
        %v1183 = vld [vmem:[%s743 + $0x28] sm:$0xf]
        %v1184 = vld [vmem:[%s743 + $0x2c] sm:$0xf]
        %v1185 = vld [vmem:[%s743 + $0x30] sm:$0xf]
        %v1186 = vld [vmem:[%s743 + $0x34] sm:$0xf]
        %v1187 = vld [vmem:[%s743 + $0x38] sm:$0xf]
        %v1188 = vld [vmem:[%s743 + $0x3c] sm:$0xf]
        %v1189 = vld [vmem:[%s747] sm:$0x1]
        %v1190 = vld [vmem:[%s747 + $0x1] sm:$0x1]
        %v1191 = vld [vmem:[%s747 + $0x2] sm:$0x1]
        %v1192 = vld [vmem:[%s747 + $0x3] sm:$0x1]
        %v1197 = vperm.slane %v1189, 0
        %v1198 = vperm.slane %v1190, 0
        %v1199 = vperm.slane %v1191, 0
        %v1200 = vperm.slane %v1192, 0
        %v1209 = vunpack.c.l.b16 %v1173
        %v1210 = vunpack.c.l.b16 %v1174
        %v1211 = vunpack.c.l.b16 %v1175
        %v1212 = vunpack.c.l.b16 %v1176
        %v1213 = vpack.c.b16 %v1210, %v1209
        %v1214 = vpack.c.b16 %v1212, %v1211
        %1217 = vmatpush.bf16.msra.mxu0 0
        %1218 = vmatpush.bf16.msra.mxu0 0
        %1219 = vmatpush.bf16.msra.mxu0 0
        %1220 = vmatpush.bf16.msra.mxu0 0
        %1221 = vmatpush.bf16.msra.mxu0 0
        %1222 = vmatpush.bf16.msra.mxu0 0
        %1223 = vmatpush.bf16.msra.mxu0 %v1214
        %1224 = vmatpush.bf16.msra.mxu0 %v1213
        %1225 = vmatmul.bf16.gmra.mxu0 %v844
        %v1226 = vpop.f32.mrf.mxu0
        %v1227 = vadd.f32 %v1197, %v1226
        %v1228 = vpop.f32.mrf.mxu0
        %1229 = vdwg.mxu0
        %v1234 = vunpack.c.l.b16 %v1177
        %v1235 = vunpack.c.l.b16 %v1178
        %v1236 = vunpack.c.l.b16 %v1179
        %v1237 = vunpack.c.l.b16 %v1180
        %v1238 = vpack.c.b16 %v1235, %v1234
        %v1239 = vpack.c.b16 %v1237, %v1236
        %1242 = vmatpush.bf16.msra.mxu0 0
        %1243 = vmatpush.bf16.msra.mxu0 0
        %1244 = vmatpush.bf16.msra.mxu0 0
        %1245 = vmatpush.bf16.msra.mxu0 0
        %1246 = vmatpush.bf16.msra.mxu0 0
        %1247 = vmatpush.bf16.msra.mxu0 0
        %1248 = vmatpush.bf16.msra.mxu0 %v1239
        %1249 = vmatpush.bf16.msra.mxu0 %v1238
        %1250 = vmatmul.bf16.gmra.mxu0 %v844
        %v1251 = vpop.f32.mrf.mxu0
        %v1252 = vadd.f32 %v1198, %v1251
        %v1253 = vpop.f32.mrf.mxu0
        %1254 = vdwg.mxu0
        %v1259 = vunpack.c.l.b16 %v1181
        %v1260 = vunpack.c.l.b16 %v1182
        %v1261 = vunpack.c.l.b16 %v1183
        %v1262 = vunpack.c.l.b16 %v1184
        %v1263 = vpack.c.b16 %v1260, %v1259
        %v1264 = vpack.c.b16 %v1262, %v1261
        %1267 = vmatpush.bf16.msra.mxu0 0
        %1268 = vmatpush.bf16.msra.mxu0 0
        %1269 = vmatpush.bf16.msra.mxu0 0
        %1270 = vmatpush.bf16.msra.mxu0 0
        %1271 = vmatpush.bf16.msra.mxu0 0
        %1272 = vmatpush.bf16.msra.mxu0 0
        %1273 = vmatpush.bf16.msra.mxu0 %v1264
        %1274 = vmatpush.bf16.msra.mxu0 %v1263
        %1275 = vmatmul.bf16.gmra.mxu0 %v844
        %v1276 = vpop.f32.mrf.mxu0
        %v1277 = vadd.f32 %v1199, %v1276
        %v1278 = vpop.f32.mrf.mxu0
        %1279 = vdwg.mxu0
        %v1284 = vunpack.c.l.b16 %v1185
        %v1285 = vunpack.c.l.b16 %v1186
        %v1286 = vunpack.c.l.b16 %v1187
        %v1287 = vunpack.c.l.b16 %v1188
        %v1288 = vpack.c.b16 %v1285, %v1284
        %v1289 = vpack.c.b16 %v1287, %v1286
        %1292 = vmatpush.bf16.msra.mxu0 0
        %1293 = vmatpush.bf16.msra.mxu0 0
        %1294 = vmatpush.bf16.msra.mxu0 0
        %1295 = vmatpush.bf16.msra.mxu0 0
        %1296 = vmatpush.bf16.msra.mxu0 0
        %1297 = vmatpush.bf16.msra.mxu0 0
        %1298 = vmatpush.bf16.msra.mxu0 %v1289
        %1299 = vmatpush.bf16.msra.mxu0 %v1288
        %1300 = vmatmul.bf16.gmra.mxu0 %v844
        %v1301 = vpop.f32.mrf.mxu0
        %v1302 = vadd.f32 %v1200, %v1301
        %v1303 = vpop.f32.mrf.mxu0
        %1304 = vdwg.mxu0
        %1305 = vmatpush.bf16.msra.mxu0 0
        %1306 = vmatpush.bf16.msra.mxu0 0
        %1307 = vmatpush.bf16.msra.mxu0 0
        %1308 = vmatpush.bf16.msra.mxu0 0
        %1309 = vmatpush.bf16.msra.mxu0 0
        %1310 = vmatpush.bf16.msra.mxu0 0
        %1311 = vmatpush.bf16.msra.mxu0 %v1214
        %1312 = vmatpush.bf16.msra.mxu0 %v1213
        %1313 = vmatmul.bf16.gmra.mxu0 %v935
        %v1314 = vpop.f32.mrf.mxu0
        %v1315 = vadd.f32 %v1197, %v1314
        %v1316 = vpop.f32.mrf.mxu0
        %1317 = vdwg.mxu0
        %1318 = vmatpush.bf16.msra.mxu0 0
        %1319 = vmatpush.bf16.msra.mxu0 0
        %1320 = vmatpush.bf16.msra.mxu0 0
        %1321 = vmatpush.bf16.msra.mxu0 0
        %1322 = vmatpush.bf16.msra.mxu0 0
        %1323 = vmatpush.bf16.msra.mxu0 0
        %1324 = vmatpush.bf16.msra.mxu0 %v1239
        %1325 = vmatpush.bf16.msra.mxu0 %v1238
        %1326 = vmatmul.bf16.gmra.mxu0 %v935
        %v1327 = vpop.f32.mrf.mxu0
        %v1328 = vadd.f32 %v1198, %v1327
        %v1329 = vpop.f32.mrf.mxu0
        %1330 = vdwg.mxu0
        %1331 = vmatpush.bf16.msra.mxu0 0
        %1332 = vmatpush.bf16.msra.mxu0 0
        %1333 = vmatpush.bf16.msra.mxu0 0
        %1334 = vmatpush.bf16.msra.mxu0 0
        %1335 = vmatpush.bf16.msra.mxu0 0
        %1336 = vmatpush.bf16.msra.mxu0 0
        %1337 = vmatpush.bf16.msra.mxu0 %v1264
        %1338 = vmatpush.bf16.msra.mxu0 %v1263
        %1339 = vmatmul.bf16.gmra.mxu0 %v935
        %v1340 = vpop.f32.mrf.mxu0
        %v1341 = vadd.f32 %v1199, %v1340
        %v1342 = vpop.f32.mrf.mxu0
        %1343 = vdwg.mxu0
        %1344 = vmatpush.bf16.msra.mxu0 0
        %1345 = vmatpush.bf16.msra.mxu0 0
        %1346 = vmatpush.bf16.msra.mxu0 0
        %1347 = vmatpush.bf16.msra.mxu0 0
        %1348 = vmatpush.bf16.msra.mxu0 0
        %1349 = vmatpush.bf16.msra.mxu0 0
        %1350 = vmatpush.bf16.msra.mxu0 %v1289
        %1351 = vmatpush.bf16.msra.mxu0 %v1288
        %1352 = vmatmul.bf16.gmra.mxu0 %v935
        %v1353 = vpop.f32.mrf.mxu0
        %v1354 = vadd.f32 %v1200, %v1353
        %v1355 = vpop.f32.mrf.mxu0
        %1356 = vdwg.mxu0
        %v1357 = vpack.c.bf16 %v856, %v856
        %v1358 = vpack.c.bf16 %v881, %v881
        %v1359 = vpack.c.bf16 %v906, %v906
        %v1360 = vpack.c.bf16 %v931, %v931
        %v1361 = vpack.c.bf16 %v947, %v947
        %v1362 = vpack.c.bf16 %v960, %v960
        %v1363 = vpack.c.bf16 %v973, %v973
        %v1364 = vpack.c.bf16 %v986, %v986
        %v1365 = vpack.c.bf16 %v1043, %v1043
        %v1366 = vpack.c.bf16 %v1068, %v1068
        %v1367 = vpack.c.bf16 %v1093, %v1093
        %v1368 = vpack.c.bf16 %v1118, %v1118
        %v1369 = vpack.c.bf16 %v1131, %v1131
        %v1370 = vpack.c.bf16 %v1144, %v1144
        %v1371 = vpack.c.bf16 %v1157, %v1157
        %v1372 = vpack.c.bf16 %v1170, %v1170
        %vm1373 = vcmask 64512
        %v1375 = vsel %vm1373, %v1357, 0
        %v1378 = vsel %vm1373, %v1365, 0
        %1380 = vmatpush.bf16.xpose.msra.mxu0 0
        %1381 = vmatpush.bf16.xpose.msra.mxu0 0
        %1382 = vmatpush.bf16.xpose.msra.mxu0 0
        %1383 = vmatpush.bf16.xpose.msra.mxu0 0
        %1384 = vmatpush.bf16.xpose.msra.mxu0 0
        %1385 = vmatpush.bf16.xpose.msra.mxu0 0
        %1386 = vmatpush.bf16.xpose.msra.mxu0 0
        %1387 = vmatpush.bf16.xpose.msra.mxu0 %v1378
        %1388 = vmatmul.bf16.gmra.mxu0 %v1375
        %v1389 = vpop.f32.mrf.mxu0
        %v1390 = vadd.f32 0.0, %v1389
        %v1391 = vpop.f32.mrf.mxu0
        %1392 = vdwg.mxu0
        %v1394 = vsel %vm1373, %v1358, 0
        %v1397 = vsel %vm1373, %v1366, 0
        %1399 = vmatpush.bf16.xpose.msra.mxu0 0
        %1400 = vmatpush.bf16.xpose.msra.mxu0 0
        %1401 = vmatpush.bf16.xpose.msra.mxu0 0
        %1402 = vmatpush.bf16.xpose.msra.mxu0 0
        %1403 = vmatpush.bf16.xpose.msra.mxu0 0
        %1404 = vmatpush.bf16.xpose.msra.mxu0 0
        %1405 = vmatpush.bf16.xpose.msra.mxu0 0
        %1406 = vmatpush.bf16.xpose.msra.mxu0 %v1397
        %1407 = vmatmul.bf16.gmra.mxu0 %v1394
        %v1408 = vpop.f32.mrf.mxu0
        %v1409 = vadd.f32 0.0, %v1408
        %v1410 = vpop.f32.mrf.mxu0
        %1411 = vdwg.mxu0
        %v1413 = vsel %vm1373, %v1359, 0
        %v1416 = vsel %vm1373, %v1367, 0
        %1418 = vmatpush.bf16.xpose.msra.mxu0 0
        %1419 = vmatpush.bf16.xpose.msra.mxu0 0
        %1420 = vmatpush.bf16.xpose.msra.mxu0 0
        %1421 = vmatpush.bf16.xpose.msra.mxu0 0
        %1422 = vmatpush.bf16.xpose.msra.mxu0 0
        %1423 = vmatpush.bf16.xpose.msra.mxu0 0
        %1424 = vmatpush.bf16.xpose.msra.mxu0 0
        %1425 = vmatpush.bf16.xpose.msra.mxu0 %v1416
        %1426 = vmatmul.bf16.gmra.mxu0 %v1413
        %v1427 = vpop.f32.mrf.mxu0
        %v1428 = vadd.f32 0.0, %v1427
        %v1429 = vpop.f32.mrf.mxu0
        %1430 = vdwg.mxu0
        %v1432 = vsel %vm1373, %v1360, 0
        %v1435 = vsel %vm1373, %v1368, 0
        %1437 = vmatpush.bf16.xpose.msra.mxu0 0
        %1438 = vmatpush.bf16.xpose.msra.mxu0 0
        %1439 = vmatpush.bf16.xpose.msra.mxu0 0
        %1440 = vmatpush.bf16.xpose.msra.mxu0 0
        %1441 = vmatpush.bf16.xpose.msra.mxu0 0
        %1442 = vmatpush.bf16.xpose.msra.mxu0 0
        %1443 = vmatpush.bf16.xpose.msra.mxu0 0
        %1444 = vmatpush.bf16.xpose.msra.mxu0 %v1435
        %1445 = vmatmul.bf16.gmra.mxu0 %v1432
        %v1446 = vpop.f32.mrf.mxu0
        %v1447 = vadd.f32 0.0, %v1446
        %v1448 = vpop.f32.mrf.mxu0
        %1449 = vdwg.mxu0
        %v1451 = vsel %vm1373, %v1361, 0
        %v1454 = vsel %vm1373, %v1369, 0
        %1456 = vmatpush.bf16.xpose.msra.mxu0 0
        %1457 = vmatpush.bf16.xpose.msra.mxu0 0
        %1458 = vmatpush.bf16.xpose.msra.mxu0 0
        %1459 = vmatpush.bf16.xpose.msra.mxu0 0
        %1460 = vmatpush.bf16.xpose.msra.mxu0 0
        %1461 = vmatpush.bf16.xpose.msra.mxu0 0
        %1462 = vmatpush.bf16.xpose.msra.mxu0 0
        %1463 = vmatpush.bf16.xpose.msra.mxu0 %v1454
        %1464 = vmatmul.bf16.gmra.mxu0 %v1451
        %v1465 = vpop.f32.mrf.mxu0
        %v1466 = vadd.f32 0.0, %v1465
        %v1467 = vpop.f32.mrf.mxu0
        %1468 = vdwg.mxu0
        %v1470 = vsel %vm1373, %v1362, 0
        %v1473 = vsel %vm1373, %v1370, 0
        %1475 = vmatpush.bf16.xpose.msra.mxu0 0
        %1476 = vmatpush.bf16.xpose.msra.mxu0 0
        %1477 = vmatpush.bf16.xpose.msra.mxu0 0
        %1478 = vmatpush.bf16.xpose.msra.mxu0 0
        %1479 = vmatpush.bf16.xpose.msra.mxu0 0
        %1480 = vmatpush.bf16.xpose.msra.mxu0 0
        %1481 = vmatpush.bf16.xpose.msra.mxu0 0
        %1482 = vmatpush.bf16.xpose.msra.mxu0 %v1473
        %1483 = vmatmul.bf16.gmra.mxu0 %v1470
        %v1484 = vpop.f32.mrf.mxu0
        %v1485 = vadd.f32 0.0, %v1484
        %v1486 = vpop.f32.mrf.mxu0
        %1487 = vdwg.mxu0
        %v1489 = vsel %vm1373, %v1363, 0
        %v1492 = vsel %vm1373, %v1371, 0
        %1494 = vmatpush.bf16.xpose.msra.mxu0 0
        %1495 = vmatpush.bf16.xpose.msra.mxu0 0
        %1496 = vmatpush.bf16.xpose.msra.mxu0 0
        %1497 = vmatpush.bf16.xpose.msra.mxu0 0
        %1498 = vmatpush.bf16.xpose.msra.mxu0 0
        %1499 = vmatpush.bf16.xpose.msra.mxu0 0
        %1500 = vmatpush.bf16.xpose.msra.mxu0 0
        %1501 = vmatpush.bf16.xpose.msra.mxu0 %v1492
        %1502 = vmatmul.bf16.gmra.mxu0 %v1489
        %v1503 = vpop.f32.mrf.mxu0
        %v1504 = vadd.f32 0.0, %v1503
        %v1505 = vpop.f32.mrf.mxu0
        %1506 = vdwg.mxu0
        %v1508 = vsel %vm1373, %v1364, 0
        %v1511 = vsel %vm1373, %v1372, 0
        %1513 = vmatpush.bf16.xpose.msra.mxu0 0
        %1514 = vmatpush.bf16.xpose.msra.mxu0 0
        %1515 = vmatpush.bf16.xpose.msra.mxu0 0
        %1516 = vmatpush.bf16.xpose.msra.mxu0 0
        %1517 = vmatpush.bf16.xpose.msra.mxu0 0
        %1518 = vmatpush.bf16.xpose.msra.mxu0 0
        %1519 = vmatpush.bf16.xpose.msra.mxu0 0
        %1520 = vmatpush.bf16.xpose.msra.mxu0 %v1511
        %1521 = vmatmul.bf16.gmra.mxu0 %v1508
        %v1522 = vpop.f32.mrf.mxu0
        %v1523 = vadd.f32 0.0, %v1522
        %v1524 = vpop.f32.mrf.mxu0
        %1525 = vdwg.mxu0
        %v1526 = vmul.f32 %v1390, 0.35355338
        %v1527 = vmul.f32 %v1409, 0.35355338
        %v1528 = vmul.f32 %v1428, 0.35355338
        %v1529 = vmul.f32 %v1447, 0.35355338
        %v1530 = vmul.f32 %v1466, 0.35355338
        %v1531 = vmul.f32 %v1485, 0.35355338
        %v1532 = vmul.f32 %v1504, 0.35355338
        %v1533 = vmul.f32 %v1523, 0.35355338
        %v1534 = vsel %vm1373, %v1526, -inf
        %1535 = vmax.xlane.f32.xlu0 %v1534
        %v1536 = vpop.xlane.xlu0 %1535
        %v1537 = vsel %vm1373, %v1527, -inf
        %1538 = vmax.xlane.f32.xlu0 %v1537
        %v1539 = vpop.xlane.xlu0 %1538
        %v1540 = vsel %vm1373, %v1528, -inf
        %1541 = vmax.xlane.f32.xlu0 %v1540
        %v1542 = vpop.xlane.xlu0 %1541
        %v1543 = vsel %vm1373, %v1529, -inf
        %1544 = vmax.xlane.f32.xlu0 %v1543
        %v1545 = vpop.xlane.xlu0 %1544
        %v1546 = vsel %vm1373, %v1530, -inf
        %1547 = vmax.xlane.f32.xlu0 %v1546
        %v1548 = vpop.xlane.xlu0 %1547
        %v1549 = vsel %vm1373, %v1531, -inf
        %1550 = vmax.xlane.f32.xlu0 %v1549
        %v1551 = vpop.xlane.xlu0 %1550
        %v1552 = vsel %vm1373, %v1532, -inf
        %1553 = vmax.xlane.f32.xlu0 %v1552
        %v1554 = vpop.xlane.xlu0 %1553
        %v1555 = vsel %vm1373, %v1533, -inf
        %1556 = vmax.xlane.f32.xlu0 %v1555
        %v1557 = vpop.xlane.xlu0 %1556
        %v1558 = vsub.f32 %v1526, %v1536
        %v1559 = vsub.f32 %v1527, %v1539
        %v1560 = vsub.f32 %v1528, %v1542
        %v1561 = vsub.f32 %v1529, %v1545
        %v1562 = vsub.f32 %v1530, %v1548
        %v1563 = vsub.f32 %v1531, %v1551
        %v1564 = vsub.f32 %v1532, %v1554
        %v1565 = vsub.f32 %v1533, %v1557
        %v1566 = vmul.f32 %v1558, 1.442695
        %v1567 = vpow.pop %v1566
        %v1568 = vmul.f32 %v1559, 1.442695
        %v1569 = vpow.pop %v1568
        %v1570 = vmul.f32 %v1560, 1.442695
        %v1571 = vpow.pop %v1570
        %v1572 = vmul.f32 %v1561, 1.442695
        %v1573 = vpow.pop %v1572
        %v1574 = vmul.f32 %v1562, 1.442695
        %v1575 = vpow.pop %v1574
        %v1576 = vmul.f32 %v1563, 1.442695
        %v1577 = vpow.pop %v1576
        %v1578 = vmul.f32 %v1564, 1.442695
        %v1579 = vpow.pop %v1578
        %v1580 = vmul.f32 %v1565, 1.442695
        %v1581 = vpow.pop %v1580
        %v1582 = vsel %vm1373, %v1567, 0.0
        %1583 = vadd.xlane.f32.xlu0 %v1582
        %v1584 = vpop.xlane.xlu0 %1583
        %v1585 = vsel %vm1373, %v1569, 0.0
        %1586 = vadd.xlane.f32.xlu0 %v1585
        %v1587 = vpop.xlane.xlu0 %1586
        %v1588 = vsel %vm1373, %v1571, 0.0
        %1589 = vadd.xlane.f32.xlu0 %v1588
        %v1590 = vpop.xlane.xlu0 %1589
        %v1591 = vsel %vm1373, %v1573, 0.0
        %1592 = vadd.xlane.f32.xlu0 %v1591
        %v1593 = vpop.xlane.xlu0 %1592
        %v1594 = vsel %vm1373, %v1575, 0.0
        %1595 = vadd.xlane.f32.xlu0 %v1594
        %v1596 = vpop.xlane.xlu0 %1595
        %v1597 = vsel %vm1373, %v1577, 0.0
        %1598 = vadd.xlane.f32.xlu0 %v1597
        %v1599 = vpop.xlane.xlu0 %1598
        %v1600 = vsel %vm1373, %v1579, 0.0
        %1601 = vadd.xlane.f32.xlu0 %v1600
        %v1602 = vpop.xlane.xlu0 %1601
        %v1603 = vsel %vm1373, %v1581, 0.0
        %1604 = vadd.xlane.f32.xlu0 %v1603
        %v1605 = vpop.xlane.xlu0 %1604
        %v1606 = vrcp.pop %v1584
        %v1607 = vrcp.pop %v1587
        %v1608 = vrcp.pop %v1590
        %v1609 = vrcp.pop %v1593
        %v1610 = vrcp.pop %v1596
        %v1611 = vrcp.pop %v1599
        %v1612 = vrcp.pop %v1602
        %v1613 = vrcp.pop %v1605
        %v1614 = vmul.f32 %v1567, %v1606
        %v1615 = vmul.f32 %v1569, %v1607
        %v1616 = vmul.f32 %v1571, %v1608
        %v1617 = vmul.f32 %v1573, %v1609
        %v1618 = vmul.f32 %v1575, %v1610
        %v1619 = vmul.f32 %v1577, %v1611
        %v1620 = vmul.f32 %v1579, %v1612
        %v1621 = vmul.f32 %v1581, %v1613
        %v1622 = vpack.c.bf16 %v1614, %v1614
        %v1623 = vpack.c.bf16 %v1615, %v1615
        %v1624 = vpack.c.bf16 %v1616, %v1616
        %v1625 = vpack.c.bf16 %v1617, %v1617
        %v1626 = vpack.c.bf16 %v1618, %v1618
        %v1627 = vpack.c.bf16 %v1619, %v1619
        %v1628 = vpack.c.bf16 %v1620, %v1620
        %v1629 = vpack.c.bf16 %v1621, %v1621
        %v1630 = vpack.c.bf16 %v1227, %v1227
        %v1631 = vpack.c.bf16 %v1252, %v1252
        %v1632 = vpack.c.bf16 %v1277, %v1277
        %v1633 = vpack.c.bf16 %v1302, %v1302
        %v1634 = vpack.c.bf16 %v1315, %v1315
        %v1635 = vpack.c.bf16 %v1328, %v1328
        %v1636 = vpack.c.bf16 %v1341, %v1341
        %v1637 = vpack.c.bf16 %v1354, %v1354
        %v1639 = vsel %vm1373, %v1622, 0
        %vm1641 = vcmask 1043456
        %v1643 = vsel %vm1641, %v1630, 0
        %1645 = vmatpush.bf16.msra.mxu0 0
        %1646 = vmatpush.bf16.msra.mxu0 0
        %1647 = vmatpush.bf16.msra.mxu0 0
        %1648 = vmatpush.bf16.msra.mxu0 0
        %1649 = vmatpush.bf16.msra.mxu0 0
        %1650 = vmatpush.bf16.msra.mxu0 0
        %1651 = vmatpush.bf16.msra.mxu0 0
        %1652 = vmatpush.bf16.msra.mxu0 %v1643
        %1653 = vmatmul.bf16.gmra.mxu0 %v1639
        %v1654 = vpop.f32.mrf.mxu0
        %v1655 = vadd.f32 0.0, %v1654
        %v1656 = vpop.f32.mrf.mxu0
        %1657 = vdwg.mxu0
        %v1659 = vsel %vm1373, %v1623, 0
        %v1662 = vsel %vm1641, %v1631, 0
        %1664 = vmatpush.bf16.msra.mxu0 0
        %1665 = vmatpush.bf16.msra.mxu0 0
        %1666 = vmatpush.bf16.msra.mxu0 0
        %1667 = vmatpush.bf16.msra.mxu0 0
        %1668 = vmatpush.bf16.msra.mxu0 0
        %1669 = vmatpush.bf16.msra.mxu0 0
        %1670 = vmatpush.bf16.msra.mxu0 0
        %1671 = vmatpush.bf16.msra.mxu0 %v1662
        %1672 = vmatmul.bf16.gmra.mxu0 %v1659
        %v1673 = vpop.f32.mrf.mxu0
        %v1674 = vadd.f32 0.0, %v1673
        %v1675 = vpop.f32.mrf.mxu0
        %1676 = vdwg.mxu0
        %v1678 = vsel %vm1373, %v1624, 0
        %v1681 = vsel %vm1641, %v1632, 0
        %1683 = vmatpush.bf16.msra.mxu0 0
        %1684 = vmatpush.bf16.msra.mxu0 0
        %1685 = vmatpush.bf16.msra.mxu0 0
        %1686 = vmatpush.bf16.msra.mxu0 0
        %1687 = vmatpush.bf16.msra.mxu0 0
        %1688 = vmatpush.bf16.msra.mxu0 0
        %1689 = vmatpush.bf16.msra.mxu0 0
        %1690 = vmatpush.bf16.msra.mxu0 %v1681
        %1691 = vmatmul.bf16.gmra.mxu0 %v1678
        %v1692 = vpop.f32.mrf.mxu0
        %v1693 = vadd.f32 0.0, %v1692
        %v1694 = vpop.f32.mrf.mxu0
        %1695 = vdwg.mxu0
        %v1697 = vsel %vm1373, %v1625, 0
        %v1700 = vsel %vm1641, %v1633, 0
        %1702 = vmatpush.bf16.msra.mxu0 0
        %1703 = vmatpush.bf16.msra.mxu0 0
        %1704 = vmatpush.bf16.msra.mxu0 0
        %1705 = vmatpush.bf16.msra.mxu0 0
        %1706 = vmatpush.bf16.msra.mxu0 0
        %1707 = vmatpush.bf16.msra.mxu0 0
        %1708 = vmatpush.bf16.msra.mxu0 0
        %1709 = vmatpush.bf16.msra.mxu0 %v1700
        %1710 = vmatmul.bf16.gmra.mxu0 %v1697
        %v1711 = vpop.f32.mrf.mxu0
        %v1712 = vadd.f32 0.0, %v1711
        %v1713 = vpop.f32.mrf.mxu0
        %1714 = vdwg.mxu0
        %v1716 = vsel %vm1373, %v1626, 0
        %v1719 = vsel %vm1641, %v1634, 0
        %1721 = vmatpush.bf16.msra.mxu0 0
        %1722 = vmatpush.bf16.msra.mxu0 0
        %1723 = vmatpush.bf16.msra.mxu0 0
        %1724 = vmatpush.bf16.msra.mxu0 0
        %1725 = vmatpush.bf16.msra.mxu0 0
        %1726 = vmatpush.bf16.msra.mxu0 0
        %1727 = vmatpush.bf16.msra.mxu0 0
        %1728 = vmatpush.bf16.msra.mxu0 %v1719
        %1729 = vmatmul.bf16.gmra.mxu0 %v1716
        %v1730 = vpop.f32.mrf.mxu0
        %v1731 = vadd.f32 0.0, %v1730
        %v1732 = vpop.f32.mrf.mxu0
        %1733 = vdwg.mxu0
        %v1735 = vsel %vm1373, %v1627, 0
        %v1738 = vsel %vm1641, %v1635, 0
        %1740 = vmatpush.bf16.msra.mxu0 0
        %1741 = vmatpush.bf16.msra.mxu0 0
        %1742 = vmatpush.bf16.msra.mxu0 0
        %1743 = vmatpush.bf16.msra.mxu0 0
        %1744 = vmatpush.bf16.msra.mxu0 0
        %1745 = vmatpush.bf16.msra.mxu0 0
        %1746 = vmatpush.bf16.msra.mxu0 0
        %1747 = vmatpush.bf16.msra.mxu0 %v1738
        %1748 = vmatmul.bf16.gmra.mxu0 %v1735
        %v1749 = vpop.f32.mrf.mxu0
        %v1750 = vadd.f32 0.0, %v1749
        %v1751 = vpop.f32.mrf.mxu0
        %1752 = vdwg.mxu0
        %v1754 = vsel %vm1373, %v1628, 0
        %v1757 = vsel %vm1641, %v1636, 0
        %1759 = vmatpush.bf16.msra.mxu0 0
        %1760 = vmatpush.bf16.msra.mxu0 0
        %1761 = vmatpush.bf16.msra.mxu0 0
        %1762 = vmatpush.bf16.msra.mxu0 0
        %1763 = vmatpush.bf16.msra.mxu0 0
        %1764 = vmatpush.bf16.msra.mxu0 0
        %1765 = vmatpush.bf16.msra.mxu0 0
        %1766 = vmatpush.bf16.msra.mxu0 %v1757
        %1767 = vmatmul.bf16.gmra.mxu0 %v1754
        %v1768 = vpop.f32.mrf.mxu0
        %v1769 = vadd.f32 0.0, %v1768
        %v1770 = vpop.f32.mrf.mxu0
        %1771 = vdwg.mxu0
        %v1773 = vsel %vm1373, %v1629, 0
        %v1776 = vsel %vm1641, %v1637, 0
        %1778 = vmatpush.bf16.msra.mxu0 0
        %1779 = vmatpush.bf16.msra.mxu0 0
        %1780 = vmatpush.bf16.msra.mxu0 0
        %1781 = vmatpush.bf16.msra.mxu0 0
        %1782 = vmatpush.bf16.msra.mxu0 0
        %1783 = vmatpush.bf16.msra.mxu0 0
        %1784 = vmatpush.bf16.msra.mxu0 0
        %1785 = vmatpush.bf16.msra.mxu0 %v1776
        %1786 = vmatmul.bf16.gmra.mxu0 %v1773
        %v1787 = vpop.f32.mrf.mxu0
        %v1788 = vadd.f32 0.0, %v1787
        %v1789 = vpop.f32.mrf.mxu0
        %1790 = vdwg.mxu0
        %v1791 = vld [vmem:[%s752] sm:$0xf]
        %v1792 = vld [vmem:[%s752 + $0x4] sm:$0xf]
        %v1793 = vld [vmem:[%s752 + $0x8] sm:$0xf]
        %v1794 = vld [vmem:[%s752 + $0xc] sm:$0xf]
        %v1795 = vpack.c.bf16 %v1655, %v1655
        %v1796 = vpack.c.bf16 %v1674, %v1674
        %v1797 = vpack.c.bf16 %v1693, %v1693
        %v1798 = vpack.c.bf16 %v1712, %v1712
        %v1799 = vpack.c.bf16 %v1731, %v1731
        %v1800 = vpack.c.bf16 %v1750, %v1750
        %v1801 = vpack.c.bf16 %v1769, %v1769
        %v1802 = vpack.c.bf16 %v1788, %v1788
        %v1804 = vsel %vm1373, %v1795, 0
        %v1807 = vsel %vm1641, %v1791, 0
        %1809 = vmatpush.bf16.msra.mxu0 0
        %1810 = vmatpush.bf16.msra.mxu0 0
        %1811 = vmatpush.bf16.msra.mxu0 0
        %1812 = vmatpush.bf16.msra.mxu0 0
        %1813 = vmatpush.bf16.msra.mxu0 0
        %1814 = vmatpush.bf16.msra.mxu0 0
        %1815 = vmatpush.bf16.msra.mxu0 0
        %1816 = vmatpush.bf16.msra.mxu0 %v1807
        %1817 = vmatmul.bf16.gmra.mxu0 %v1804
        %v1818 = vpop.f32.mrf.mxu0
        %v1819 = vadd.f32 0.0, %v1818
        %v1820 = vpop.f32.mrf.mxu0
        %1821 = vdwg.mxu0
        %v1823 = vsel %vm1373, %v1796, 0
        %v1826 = vsel %vm1641, %v1792, 0
        %1828 = vmatpush.bf16.msra.mxu0 0
        %1829 = vmatpush.bf16.msra.mxu0 0
        %1830 = vmatpush.bf16.msra.mxu0 0
        %1831 = vmatpush.bf16.msra.mxu0 0
        %1832 = vmatpush.bf16.msra.mxu0 0
        %1833 = vmatpush.bf16.msra.mxu0 0
        %1834 = vmatpush.bf16.msra.mxu0 0
        %1835 = vmatpush.bf16.msra.mxu0 %v1826
        %1836 = vmatmul.bf16.gmra.mxu0 %v1823
        %v1837 = vpop.f32.mrf.mxu0
        %v1838 = vadd.f32 0.0, %v1837
        %v1839 = vpop.f32.mrf.mxu0
        %1840 = vdwg.mxu0
        %v1842 = vsel %vm1373, %v1797, 0
        %v1845 = vsel %vm1641, %v1793, 0
        %1847 = vmatpush.bf16.msra.mxu0 0
        %1848 = vmatpush.bf16.msra.mxu0 0
        %1849 = vmatpush.bf16.msra.mxu0 0
        %1850 = vmatpush.bf16.msra.mxu0 0
        %1851 = vmatpush.bf16.msra.mxu0 0
        %1852 = vmatpush.bf16.msra.mxu0 0
        %1853 = vmatpush.bf16.msra.mxu0 0
        %1854 = vmatpush.bf16.msra.mxu0 %v1845
        %1855 = vmatmul.bf16.gmra.mxu0 %v1842
        %v1856 = vpop.f32.mrf.mxu0
        %v1857 = vadd.f32 0.0, %v1856
        %v1858 = vpop.f32.mrf.mxu0
        %1859 = vdwg.mxu0
        %v1861 = vsel %vm1373, %v1798, 0
        %v1864 = vsel %vm1641, %v1794, 0
        %1866 = vmatpush.bf16.msra.mxu0 0
        %1867 = vmatpush.bf16.msra.mxu0 0
        %1868 = vmatpush.bf16.msra.mxu0 0
        %1869 = vmatpush.bf16.msra.mxu0 0
        %1870 = vmatpush.bf16.msra.mxu0 0
        %1871 = vmatpush.bf16.msra.mxu0 0
        %1872 = vmatpush.bf16.msra.mxu0 0
        %1873 = vmatpush.bf16.msra.mxu0 %v1864
        %1874 = vmatmul.bf16.gmra.mxu0 %v1861
        %v1875 = vpop.f32.mrf.mxu0
        %v1876 = vadd.f32 0.0, %v1875
        %v1877 = vpop.f32.mrf.mxu0
        %1878 = vdwg.mxu0
        %v1880 = vsel %vm1373, %v1799, 0
        %1882 = vmatpush.bf16.msra.mxu0 0
        %1883 = vmatpush.bf16.msra.mxu0 0
        %1884 = vmatpush.bf16.msra.mxu0 0
        %1885 = vmatpush.bf16.msra.mxu0 0
        %1886 = vmatpush.bf16.msra.mxu0 0
        %1887 = vmatpush.bf16.msra.mxu0 0
        %1888 = vmatpush.bf16.msra.mxu0 0
        %1889 = vmatpush.bf16.msra.mxu0 %v1807
        %1890 = vmatmul.bf16.gmra.mxu0 %v1880
        %v1891 = vpop.f32.mrf.mxu0
        %v1892 = vadd.f32 0.0, %v1891
        %v1893 = vpop.f32.mrf.mxu0
        %1894 = vdwg.mxu0
        %v1896 = vsel %vm1373, %v1800, 0
        %1898 = vmatpush.bf16.msra.mxu0 0
        %1899 = vmatpush.bf16.msra.mxu0 0
        %1900 = vmatpush.bf16.msra.mxu0 0
        %1901 = vmatpush.bf16.msra.mxu0 0
        %1902 = vmatpush.bf16.msra.mxu0 0
        %1903 = vmatpush.bf16.msra.mxu0 0
        %1904 = vmatpush.bf16.msra.mxu0 0
        %1905 = vmatpush.bf16.msra.mxu0 %v1826
        %1906 = vmatmul.bf16.gmra.mxu0 %v1896
        %v1907 = vpop.f32.mrf.mxu0
        %v1908 = vadd.f32 0.0, %v1907
        %v1909 = vpop.f32.mrf.mxu0
        %1910 = vdwg.mxu0
        %v1912 = vsel %vm1373, %v1801, 0
        %1914 = vmatpush.bf16.msra.mxu0 0
        %1915 = vmatpush.bf16.msra.mxu0 0
        %1916 = vmatpush.bf16.msra.mxu0 0
        %1917 = vmatpush.bf16.msra.mxu0 0
        %1918 = vmatpush.bf16.msra.mxu0 0
        %1919 = vmatpush.bf16.msra.mxu0 0
        %1920 = vmatpush.bf16.msra.mxu0 0
        %1921 = vmatpush.bf16.msra.mxu0 %v1845
        %1922 = vmatmul.bf16.gmra.mxu0 %v1912
        %v1923 = vpop.f32.mrf.mxu0
        %v1924 = vadd.f32 0.0, %v1923
        %v1925 = vpop.f32.mrf.mxu0
        %1926 = vdwg.mxu0
        %v1928 = vsel %vm1373, %v1802, 0
        %1930 = vmatpush.bf16.msra.mxu0 0
        %1931 = vmatpush.bf16.msra.mxu0 0
        %1932 = vmatpush.bf16.msra.mxu0 0
        %1933 = vmatpush.bf16.msra.mxu0 0
        %1934 = vmatpush.bf16.msra.mxu0 0
        %1935 = vmatpush.bf16.msra.mxu0 0
        %1936 = vmatpush.bf16.msra.mxu0 0
        %1937 = vmatpush.bf16.msra.mxu0 %v1864
        %1938 = vmatmul.bf16.gmra.mxu0 %v1928
        %v1939 = vpop.f32.mrf.mxu0
        %v1940 = vadd.f32 0.0, %v1939
        %v1941 = vpop.f32.mrf.mxu0
        %1942 = vdwg.mxu0
        %v1943 = vsel %vm842, %v1819, 0.0
        %v1944 = vsel %vm842, %v1838, 0.0
        %v1945 = vadd.f32 %v1943, %v1944
        %v1946 = vsel %vm842, %v1857, 0.0
        %v1947 = vadd.f32 %v1945, %v1946
        %v1948 = vsel %vm842, %v1876, 0.0
        %v1949 = vadd.f32 %v1947, %v1948
        %v1950 = vsel %vm842, %v1892, 0.0
        %v1951 = vsel %vm842, %v1908, 0.0
        %v1952 = vadd.f32 %v1950, %v1951
        %v1953 = vsel %vm842, %v1924, 0.0
        %v1954 = vadd.f32 %v1952, %v1953
        %v1955 = vsel %vm842, %v1940, 0.0
        %v1956 = vadd.f32 %v1954, %v1955
        %v1957 = vld [vmem:[%s755] sm:$0x1]
        %v1959 = vperm.slane %v1957, 0
        %v1961 = vadd.f32 %v1949, %v1959
        %v1962 = vadd.f32 %v1956, %v1959
        %v1963 = vadd.f32 %v1961, %v794
        %v1964 = vadd.f32 %v1962, %v795
        %v1965 = vsel %vm842, %v1963, 0.0
        %1966 = vadd.xlane.f32.xlu0 %v1965
        %v1967 = vpop.xlane.xlu0 %1966
        %v1968 = vsel %vm842, %v1964, 0.0
        %1969 = vadd.xlane.f32.xlu0 %v1968
        %v1970 = vpop.xlane.xlu0 %1969
        %v1971 = vrcp.pop 32.0
        %v1972 = vmul.f32 32.0, %v1971
        %v1973 = vsub.f32 1.0, %v1972
        %v1974 = vmul.f32 %v1971, %v1973
        %v1975 = vadd.f32 %v1971, %v1974
        %vm1976 = vweird.f32 %v1971
        %v1977 = vsel %vm1976, %v1971, %v1975
        %v1978 = vmul.f32 %v1967, %v1977
        %v1979 = vmul.f32 %v1970, %v1977
        %v1980 = vsub.f32 %v1963, %v1978
        %v1981 = vsub.f32 %v1964, %v1979
        %v1982 = vmul.f32 %v1980, %v1980
        %v1983 = vmul.f32 %v1981, %v1981
        %v1984 = vsel %vm842, %v1982, 0.0
        %1985 = vadd.xlane.f32.xlu0 %v1984
        %v1986 = vpop.xlane.xlu0 %1985
        %v1987 = vsel %vm842, %v1983, 0.0
        %1988 = vadd.xlane.f32.xlu0 %v1987
        %v1989 = vpop.xlane.xlu0 %1988
        %v1990 = vmul.f32 %v1986, %v1977
        %v1991 = vmul.f32 %v1989, %v1977
        %v1992 = vadd.f32 %v1990, 1e-05
        %v1993 = vadd.f32 %v1991, 1e-05
        %v1994 = vrsqrt.pop %v1992
        %v1995 = vmul.f32 %v1994, %v1992
        %v1996 = vmul.f32 %v1995, %v1994
        %v1997 = vmul.f32 0.5, %v1996
        %v1998 = vsub.f32 1.5, %v1997
        %v1999 = vmul.f32 %v1994, %v1998
        %vm2000 = vweird.f32 %v1992
        %vm2001 = vweird.f32 %v1994
        %vm2002 = vmor %vm2000, %vm2001
        %v2003 = vsel %vm2002, %v1994, %v1999
        %v2004 = vrsqrt.pop %v1993
        %v2005 = vmul.f32 %v2004, %v1993
        %v2006 = vmul.f32 %v2005, %v2004
        %v2007 = vmul.f32 0.5, %v2006
        %v2008 = vsub.f32 1.5, %v2007
        %v2009 = vmul.f32 %v2004, %v2008
        %vm2010 = vweird.f32 %v1993
        %vm2011 = vweird.f32 %v2004
        %vm2012 = vmor %vm2010, %vm2011
        %v2013 = vsel %vm2012, %v2004, %v2009
        %v2014 = vmul.f32 %v1980, %v2003
        %v2015 = vmul.f32 %v1981, %v2013
        %v2016 = vld [vmem:[%s758] sm:$0x1]
        %v2018 = vperm.slane %v2016, 0
        %v2020 = vmul.f32 %v2014, %v2018
        %v2021 = vmul.f32 %v2015, %v2018
        %v2022 = vld [vmem:[%s761] sm:$0x1]
        %v2024 = vperm.slane %v2022, 0
        %v2026 = vadd.f32 %v2020, %v2024
        %v2027 = vadd.f32 %v2021, %v2024
        %v2028 = vpack.c.bf16 %v2027, %v2026
        %v2029 = vld [vmem:[%s766] sm:$0xf]
        %v2030 = vld [vmem:[%s766 + $0x4] sm:$0xf]
        %v2031 = vld [vmem:[%s766 + $0x8] sm:$0xf]
        %v2032 = vld [vmem:[%s766 + $0xc] sm:$0xf]
        %v2033 = vld [vmem:[%s769] sm:$0x1]
        %v2035 = vperm.slane %v2033, 0
        %v2041 = vunpack.c.l.b16 %v2029
        %v2042 = vunpack.c.l.b16 %v2030
        %v2043 = vunpack.c.l.b16 %v2031
        %v2044 = vunpack.c.l.b16 %v2032
        %v2045 = vpack.c.b16 %v2042, %v2041
        %v2046 = vpack.c.b16 %v2044, %v2043
        %v2050 = vsel %vm842, %v2028, 0
        %2052 = vmatpush.bf16.msra.mxu0 0
        %2053 = vmatpush.bf16.msra.mxu0 0
        %2054 = vmatpush.bf16.msra.mxu0 0
        %2055 = vmatpush.bf16.msra.mxu0 0
        %2056 = vmatpush.bf16.msra.mxu0 0
        %2057 = vmatpush.bf16.msra.mxu0 0
        %2058 = vmatpush.bf16.msra.mxu0 %v2046
        %2059 = vmatpush.bf16.msra.mxu0 %v2045
        %2060 = vmatmul.bf16.gmra.mxu0 %v2050
        %v2061 = vpop.f32.mrf.mxu0
        %v2062 = vadd.f32 %v2035, %v2061
        %v2063 = vpop.f32.mrf.mxu0
        %v2064 = vadd.f32 %v2035, %v2063
        %2065 = vdwg.mxu0
        %v2066 = vmax.f32 %v2062, 0.0
        %v2067 = vmax.f32 %v2064, 0.0
        %v2068 = vpack.c.bf16 %v2067, %v2066
        %v2069 = vld [vmem:[%s774] sm:$0xf]
        %v2070 = vld [vmem:[%s774 + $0x4] sm:$0xf]
        %v2071 = vld [vmem:[%s774 + $0x8] sm:$0xf]
        %v2072 = vld [vmem:[%s774 + $0xc] sm:$0xf]
        %v2073 = vld [vmem:[%s774 + $0x10] sm:$0xf]
        %v2074 = vld [vmem:[%s774 + $0x14] sm:$0xf]
        %v2075 = vld [vmem:[%s774 + $0x18] sm:$0xf]
        %v2076 = vld [vmem:[%s774 + $0x1c] sm:$0xf]
        %v2077 = vld [vmem:[%s777] sm:$0x1]
        %v2079 = vperm.slane %v2077, 0
        %v2089 = vunpack.c.l.b16 %v2069
        %v2090 = vunpack.c.l.b16 %v2070
        %v2091 = vunpack.c.l.b16 %v2071
        %v2092 = vunpack.c.l.b16 %v2072
        %v2093 = vunpack.c.l.b16 %v2073
        %v2094 = vunpack.c.l.b16 %v2074
        %v2095 = vunpack.c.l.b16 %v2075
        %v2096 = vunpack.c.l.b16 %v2076
        %v2097 = vpack.c.b16 %v2090, %v2089
        %v2098 = vpack.c.b16 %v2092, %v2091
        %v2099 = vpack.c.b16 %v2094, %v2093
        %v2100 = vpack.c.b16 %v2096, %v2095
        %vm2105 = vcmask 523264
        %v2107 = vsel %vm2105, %v2068, 0
        %2109 = vmatpush.bf16.msra.mxu0 0
        %2110 = vmatpush.bf16.msra.mxu0 0
        %2111 = vmatpush.bf16.msra.mxu0 0
        %2112 = vmatpush.bf16.msra.mxu0 0
        %2113 = vmatpush.bf16.msra.mxu0 %v2100
        %2114 = vmatpush.bf16.msra.mxu0 %v2099
        %2115 = vmatpush.bf16.msra.mxu0 %v2098
        %2116 = vmatpush.bf16.msra.mxu0 %v2097
        %2117 = vmatmul.bf16.gmra.mxu0 %v2107
        %v2118 = vpop.f32.mrf.mxu0
        %v2119 = vadd.f32 %v2079, %v2118
        %v2120 = vpop.f32.mrf.mxu0
        %v2121 = vadd.f32 %v2079, %v2120
        %2122 = vdwg.mxu0
        %v2123 = vadd.f32 %v2119, %v2026
        %v2124 = vadd.f32 %v2121, %v2027
        %v2125 = vsel %vm842, %v2123, 0.0
        %2126 = vadd.xlane.f32.xlu0 %v2125
        %v2127 = vpop.xlane.xlu0 %2126
        %v2128 = vsel %vm842, %v2124, 0.0
        %2129 = vadd.xlane.f32.xlu0 %v2128
        %v2130 = vpop.xlane.xlu0 %2129
        %v2131 = vmul.f32 %v2127, %v1977
        %v2132 = vmul.f32 %v2130, %v1977
        %v2133 = vsub.f32 %v2123, %v2131
        %v2134 = vsub.f32 %v2124, %v2132
        %v2135 = vmul.f32 %v2133, %v2133
        %v2136 = vmul.f32 %v2134, %v2134
        %v2137 = vsel %vm842, %v2135, 0.0
        %2138 = vadd.xlane.f32.xlu0 %v2137
        %v2139 = vpop.xlane.xlu0 %2138
        %v2140 = vsel %vm842, %v2136, 0.0
        %2141 = vadd.xlane.f32.xlu0 %v2140
        %v2142 = vpop.xlane.xlu0 %2141
        %v2143 = vmul.f32 %v2139, %v1977
        %v2144 = vmul.f32 %v2142, %v1977
        %v2145 = vadd.f32 %v2143, 1e-05
        %v2146 = vadd.f32 %v2144, 1e-05
        %v2147 = vrsqrt.pop %v2145
        %v2148 = vmul.f32 %v2147, %v2145
        %v2149 = vmul.f32 %v2148, %v2147
        %v2150 = vmul.f32 0.5, %v2149
        %v2151 = vsub.f32 1.5, %v2150
        %v2152 = vmul.f32 %v2147, %v2151
        %vm2153 = vweird.f32 %v2145
        %vm2154 = vweird.f32 %v2147
        %vm2155 = vmor %vm2153, %vm2154
        %v2156 = vsel %vm2155, %v2147, %v2152
        %v2157 = vrsqrt.pop %v2146
        %v2158 = vmul.f32 %v2157, %v2146
        %v2159 = vmul.f32 %v2158, %v2157
        %v2160 = vmul.f32 0.5, %v2159
        %v2161 = vsub.f32 1.5, %v2160
        %v2162 = vmul.f32 %v2157, %v2161
        %vm2163 = vweird.f32 %v2146
        %vm2164 = vweird.f32 %v2157
        %vm2165 = vmor %vm2163, %vm2164
        %v2166 = vsel %vm2165, %v2157, %v2162
        %v2167 = vmul.f32 %v2133, %v2156
        %v2168 = vmul.f32 %v2134, %v2166
        %v2169 = vld [vmem:[%s780] sm:$0x1]
        %v2171 = vperm.slane %v2169, 0
        %v2173 = vmul.f32 %v2167, %v2171
        %v2174 = vmul.f32 %v2168, %v2171
        %v2175 = vld [vmem:[%s783] sm:$0x1]
        %v2177 = vperm.slane %v2175, 0
        %v2179 = vadd.f32 %v2173, %v2177
        %v2180 = vadd.f32 %v2174, %v2177
        %2181 = vst.msk [vmem:[#allocation2] sm:$0xff] %vm842, %v2179
        %2182 = vst.msk [vmem:[#allocation2 + $0x8] sm:$0xff] %vm842, %v2180
        %p2183 = scmp.eq.s32.totalorder %s29, 1
        // Predicated region
        $region93: #{tpu_custom_call.1} parent=87 // pred_check
          %p2184 = pneg %p2183
        $region94: #{tpu_custom_call.1} parent=87 // pred_check_branch
          %2186 = sbr.rel (%p2184) target = $region96
        $region95: #{tpu_custom_call.1} parent=87 // pred_region
          %v2187 = vsel %vm842, %v2179, 0.0
          %v2188 = vsel %vm842, %v2180, 0.0
          %2189 = vst [vmem:[#allocation3] sm:$0xff] %v2187
          %2190 = vst [vmem:[#allocation3 + $0x8] sm:$0xff] %v2188
        $region96: #{tpu_custom_call.1} parent=87 // pred_fallthru
          _
        // Predicated region
        $region97: #{tpu_custom_call.1} parent=87 // pred_check
          %p2191 = pneg %p479
        $region98: #{tpu_custom_call.1} parent=87 // pred_check_branch
          %2193 = sbr.rel (%p2191) target = $region100
        $region99: #{tpu_custom_call.1} parent=87 // pred_region
          %2195 = vsyncadd [#allocation4], 0
          %s2196 = sshll.u32 [#allocation3], 4
          %s2197 = int_to_ptr.vmem [resolvable:$true] %s2196
          %s2198 = sshll.u32 %s17, 4
          %s2199 = int_to_ptr.hbm [resolvable:$true] %s2198
          %2204 = dma.vmem_to_hbm [thread:$0]  %s2197, 256, %s2199, [#allocation4], 128, 128, 8
        $region100: #{tpu_custom_call.1} parent=87 // pred_fallthru
          _
        // Predicated region
        $region101: #{tpu_custom_call.1} parent=87 // pred_check
          %p2205 = pneg %p479
        $region102: #{tpu_custom_call.1} parent=87 // pred_check_branch
          %2207 = sbr.rel (%p2205) target = $region104
        $region103: #{tpu_custom_call.1} parent=87 // pred_region
          %2209 = dma.done [#allocation4], 256
        $region104: #{tpu_custom_call.1} parent=87 // pred_fallthru
          _
      $region88: #{tpu_custom_call.1} parent=5 // pred_fallthru
        _
      %p2210 = scmp.le.s32.totalorder 2, %s24
      // Predicated region
      $region105: #{tpu_custom_call.1} parent=5 // pred_check
        %p2211 = pneg %p2210
      $region106: #{tpu_custom_call.1} parent=5 // pred_check_branch
        %2213 = sbr.rel (%p2211) target = $region108
      $region107: #{tpu_custom_call.1} parent=5 // pred_region
        %s2214 = ssub.s32 %s24, 2
      $region108: #{tpu_custom_call.1} parent=5 // pred_fallthru
        _
    $region6: #{tpu_custom_call.1} parent=1 // loop_footer
      %s28 = sadd.s32 1, %s24
    $region7: #{tpu_custom_call.1} parent=1 // loop_footer_branch
      %23 = sbr.rel target = $region3
    $region8: #{tpu_custom_call.1} parent=1 // loop_exit
      _
    %2215 = vsyncpa [#allocation4], 1
    %s2216 = scalar_lea.sflag [#allocation4], 1
    %2217 = vsyncpa %s2216, 1

</llo_original>
